<compile_context>
chip_gen: v7x
topology: tpu7x:2x2x1
jax: 0.10.0
libtpu: 0.0.40
codegen_flags: <defaults>
</compile_context>

<pallas_src>
import math
import functools

import jax
import jax.numpy as jnp
from jax.experimental import pallas as pl
from jax.experimental.pallas import tpu as pltpu


# ---------------------------------------------------------------------------
# Fused MHA kernel: one grid step == one batch element
# ---------------------------------------------------------------------------
def _mha_kernel(q_ref, k_ref, v_ref, mask_ref,
                wqkv_ref, bqkv_ref, wo_ref, bo_ref,
                o_ref, *, heads, d_k):
    scale = jnp.float32(1.0 / math.sqrt(d_k))

    xq = q_ref[0].astype(jnp.bfloat16)           # (S, D)
    xk = k_ref[0].astype(jnp.bfloat16)
    xv = v_ref[0].astype(jnp.bfloat16)

    # --- Q/K/V projections (bf16 inputs, f32 accumulation) -----------------
    q2 = jnp.dot(xq, wqkv_ref[0], preferred_element_type=jnp.float32) + bqkv_ref[0]
    k2 = jnp.dot(xk, wqkv_ref[1], preferred_element_type=jnp.float32) + bqkv_ref[1]
    v2 = jnp.dot(xv, wqkv_ref[2], preferred_element_type=jnp.float32) + bqkv_ref[2]

    # fold 1/sqrt(d_k) into q once (S*D multiplies instead of H*S*S)
    q2 = q2 * scale

    qb = q2.astype(jnp.bfloat16)
    kb = k2.astype(jnp.bfloat16)
    vb = v2.astype(jnp.bfloat16)

    # mask: 0 => masked.  Comparison hoisted out of the head loop (heads share
    # the same (S, S) mask, matching torch's mask.unsqueeze(1) broadcast).
    masked = mask_ref[0] == 0                    # (S, S) bool
    neg = jnp.float32(-10000.0)

    # --- per-head attention: static loop, static lane slices ---------------
    head_out = []
    for h in range(heads):
        lo = h * d_k
        qh = qb[:, lo:lo + d_k]                  # (S, d_k)
        kh = kb[:, lo:lo + d_k]
        vh = vb[:, lo:lo + d_k]

        # scores = qh @ kh^T  (contract on d_k of both operands, f32 acc)
        s = jax.lax.dot_general(qh, kh, (((1,), (1,)), ((), ())),
                                preferred_element_type=jnp.float32)   # (S, S)
        s = jnp.where(masked, neg, s)            # masked_fill(-10000) semantics
        s = s - jnp.max(s, axis=-1, keepdims=True)
        p = jnp.exp(s)
        p = p * pl.reciprocal(jnp.sum(p, axis=-1, keepdims=True), approx=True)
        head_out.append(
            jnp.dot(p.astype(jnp.bfloat16), vh,
                    preferred_element_type=jnp.float32))              # (S, d_k)

    concat = jnp.concatenate(head_out, axis=-1)  # (S, D), lane-dense

    # --- output projection --------------------------------------------------
    out = jnp.dot(concat.astype(jnp.bfloat16), wo_ref[...],
                  preferred_element_type=jnp.float32) + bo_ref[...]
    o_ref[0] = out.astype(o_ref.dtype)


# ---------------------------------------------------------------------------
# Module forward
# ---------------------------------------------------------------------------
def mha_forward(params, q, k, v, mask):
    """q/k/v: (B, S, D) float32; mask: (B, S, S) with 0 = masked."""
    B, S, D = q.shape
    H = params["heads"]
    d_k = D // H

    # Stack the three projection weights once; bf16 weights halve DMA traffic.
    wqkv = jnp.stack([params["wq"], params["wk"], params["wv"]]).astype(jnp.bfloat16)
    bqkv = jnp.stack([params["bq"], params["bk"], params["bv"]])   # (3, D) f32
    wo = params["wo"].astype(jnp.bfloat16)                         # (D, D)
    bo = params["bo"].reshape(1, D)                                # (1, D) f32

    kern = functools.partial(_mha_kernel, heads=H, d_k=d_k)
    return pl.pallas_call(
        kern,
        out_shape=jax.ShapeDtypeStruct((B, S, D), jnp.float32),
        grid=(B,),
        in_specs=[
            pl.BlockSpec((1, S, D), lambda b: (b, 0, 0)),    # q
            pl.BlockSpec((1, S, D), lambda b: (b, 0, 0)),    # k
            pl.BlockSpec((1, S, D), lambda b: (b, 0, 0)),    # v
            pl.BlockSpec((1, S, S), lambda b: (b, 0, 0)),    # mask
            pl.BlockSpec((3, D, D), lambda b: (0, 0, 0)),    # Wq|Wk|Wv (bf16)
            pl.BlockSpec((3, D),    lambda b: (0, 0)),       # bq|bk|bv (f32)
            pl.BlockSpec((D, D),    lambda b: (0, 0)),       # Wo (bf16)
            pl.BlockSpec((1, D),    lambda b: (0, 0)),       # bo (f32)
        ],
        out_specs=pl.BlockSpec((1, S, D), lambda b: (b, 0, 0)),
        compiler_params=pltpu.CompilerParams(
            dimension_semantics=("parallel",)),
    )(q, k, v, mask, wqkv, bqkv, wo, bo)


# ---------------------------------------------------------------------------
# Deterministic parameter init (matches nn.Linear shapes; uniform +-1/sqrt(fan_in))
# ---------------------------------------------------------------------------
def init_params(key, d_model, heads):
    bound = 1.0 / math.sqrt(d_model)
    keys = jax.random.split(key, 8)

    def w(k):  # stored as (in, out) == torch weight transposed
        return jax.random.uniform(k, (d_model, d_model), jnp.float32, -bound, bound)

    def b(k):
        return jax.random.uniform(k, (d_model,), jnp.float32, -bound, bound)

    return {
        "heads": heads,
        "wq": w(keys[0]), "bq": b(keys[1]),
        "wk": w(keys[2]), "bk": b(keys[3]),
        "wv": w(keys[4]), "bv": b(keys[5]),
        "wo": w(keys[6]), "bo": b(keys[7]),
    }


# ---------------------------------------------------------------------------
# Pure-JAX f32 reference (correctness check)
# ---------------------------------------------------------------------------
def mha_reference(params, q, k, v, mask):
    B, S, D = q.shape
    H = params["heads"]
    d_k = D // H

    def lin(x, w, b):
        return x @ w + b

    qh = lin(q, params["wq"], params["bq"]).reshape(B, S, H, d_k).transpose(0, 2, 1, 3)
    kh = lin(k, params["wk"], params["bk"]).reshape(B, S, H, d_k).transpose(0, 2, 1, 3)
    vh = lin(v, params["wv"], params["bv"]).reshape(B, S, H, d_k).transpose(0, 2, 1, 3)

    scores = jnp.einsum("bhqd,bhkd->bhqk", qh, kh) / math.sqrt(d_k)
    scores = jnp.where(mask[:, None, :, :] == 0, -10000.0, scores)
    p = jax.nn.softmax(scores, axis=-1)
    attn = jnp.einsum("bhqk,bhkd->bhqd", p, vh)
    concat = attn.transpose(0, 2, 1, 3).reshape(B, S, D)
    return lin(concat, params["wo"], params["bo"])


# ---------------------------------------------------------------------------
if __name__ == "__main__":
    B, S, D_MODEL, HEADS = 2, 8, 32, 4

    root = jax.random.PRNGKey(0)
    kp, kq, kk, kv = jax.random.split(root, 4)

    params = init_params(kp, D_MODEL, HEADS)
    q = jax.random.normal(kq, (B, S, D_MODEL), jnp.float32)
    k = jax.random.normal(kk, (B, S, D_MODEL), jnp.float32)
    v = jax.random.normal(kv, (B, S, D_MODEL), jnp.float32)

    # causal mask (decoder-style), broadcast over heads inside the kernel
    mask = jnp.tril(jnp.ones((S, S), jnp.float32))[None, :, :].repeat(B, axis=0)

    out = mha_forward(params, q, k, v, mask)
    out = jax.block_until_ready(out)

    ref = mha_reference(params, q, k, v, mask)
    assert out.shape == (B, S, D_MODEL)
    # bf16 matmul inputs + approx reciprocal => tolerance looser than pure-f32
    assert jnp.allclose(out, ref, atol=5e-2, rtol=5e-2), "mismatch vs reference"

    print("KERNEL_OK")
</pallas_src>

<mosaic_0001>
module attributes {stable_mosaic.version = 11 : i64} {
  func.func @_mha_kernel(%arg0: i32, %arg1: memref<1x8x32xf32, #tpu.memory_space<vmem>>, %arg2: memref<1x8x32xf32, #tpu.memory_space<vmem>>, %arg3: memref<1x8x32xf32, #tpu.memory_space<vmem>>, %arg4: memref<1x8x8xf32, #tpu.memory_space<vmem>>, %arg5: memref<3x32x32xbf16, #tpu.memory_space<vmem>>, %arg6: memref<3x32xf32, #tpu.memory_space<vmem>>, %arg7: memref<32x32xbf16, #tpu.memory_space<vmem>>, %arg8: memref<1x32xf32, #tpu.memory_space<vmem>>, %arg9: memref<1x8x32xf32, #tpu.memory_space<vmem>>) attributes {dimension_semantics = [#tpu.dimension_semantics<parallel>], iteration_bounds = array<i64: 2>, scalar_prefetch = 0 : i64, scratch_operands = 0 : i64, tpu.core_type = #tpu.core_type<tc>, window_params = [{transform_indices = @transform_0, window_bounds = array<i64: 1, 8, 32>}, {transform_indices = @transform_1, window_bounds = array<i64: 1, 8, 32>}, {transform_indices = @transform_2, window_bounds = array<i64: 1, 8, 32>}, {transform_indices = @transform_3, window_bounds = array<i64: 1, 8, 8>}, {pipeline_mode = #tpu.pipeline_mode<synchronous>, transform_indices = @transform_4, window_bounds = array<i64: 3, 32, 32>}, {pipeline_mode = #tpu.pipeline_mode<synchronous>, transform_indices = @transform_5, window_bounds = array<i64: 3, 32>}, {pipeline_mode = #tpu.pipeline_mode<synchronous>, transform_indices = @transform_6, window_bounds = array<i64: 32, 32>}, {pipeline_mode = #tpu.pipeline_mode<synchronous>, transform_indices = @transform_7, window_bounds = array<i64: 1, 32>}, {transform_indices = @transform_8, window_bounds = array<i64: 1, 8, 32>}]} {
    %c0 = arith.constant 0 : index
    %c0_0 = arith.constant 0 : index
    %c0_1 = arith.constant 0 : index
    %0 = vector.load %arg1[%c0, %c0_0, %c0_1] : memref<1x8x32xf32, #tpu.memory_space<vmem>>, vector<1x8x32xf32>
    %1 = vector.shape_cast %0 : vector<1x8x32xf32> to vector<8x32xf32>
    %2 = arith.truncf %1 : vector<8x32xf32> to vector<8x32xbf16>
    %c0_2 = arith.constant 0 : index
    %c0_3 = arith.constant 0 : index
    %c0_4 = arith.constant 0 : index
    %3 = vector.load %arg2[%c0_2, %c0_3, %c0_4] : memref<1x8x32xf32, #tpu.memory_space<vmem>>, vector<1x8x32xf32>
    %4 = vector.shape_cast %3 : vector<1x8x32xf32> to vector<8x32xf32>
    %5 = arith.truncf %4 : vector<8x32xf32> to vector<8x32xbf16>
    %c0_5 = arith.constant 0 : index
    %c0_6 = arith.constant 0 : index
    %c0_7 = arith.constant 0 : index
    %6 = vector.load %arg3[%c0_5, %c0_6, %c0_7] : memref<1x8x32xf32, #tpu.memory_space<vmem>>, vector<1x8x32xf32>
    %7 = vector.shape_cast %6 : vector<1x8x32xf32> to vector<8x32xf32>
    %8 = arith.truncf %7 : vector<8x32xf32> to vector<8x32xbf16>
    %c0_8 = arith.constant 0 : index
    %c0_9 = arith.constant 0 : index
    %c0_10 = arith.constant 0 : index
    %9 = vector.load %arg5[%c0_8, %c0_9, %c0_10] : memref<3x32x32xbf16, #tpu.memory_space<vmem>>, vector<1x32x32xbf16>
    %10 = vector.shape_cast %9 : vector<1x32x32xbf16> to vector<32x32xbf16>
    %cst = arith.constant dense<0.000000e+00> : vector<8x32xf32>
    %11 = tpu.matmul %2, %10, %cst {dimension_numbers = #tpu.dot_dimension_numbers<[1], [0], [0], [1], [0, 0, 1, 1], [], []>} : vector<8x32xbf16>, vector<32x32xbf16>, vector<8x32xf32> -> vector<8x32xf32>
    %c0_11 = arith.constant 0 : index
    %c0_12 = arith.constant 0 : index
    %12 = vector.load %arg6[%c0_11, %c0_12] : memref<3x32xf32, #tpu.memory_space<vmem>>, vector<1x32xf32>
    %13 = vector.shape_cast %12 : vector<1x32xf32> to vector<32xf32>
    %14 = vector.shape_cast %13 : vector<32xf32> to vector<1x32xf32>
    %15 = vector.broadcast %14 : vector<1x32xf32> to vector<8x32xf32>
    %16 = arith.addf %11, %15 : vector<8x32xf32>
    %c1 = arith.constant 1 : index
    %c0_13 = arith.constant 0 : index
    %c0_14 = arith.constant 0 : index
    %17 = vector.load %arg5[%c1, %c0_13, %c0_14] : memref<3x32x32xbf16, #tpu.memory_space<vmem>>, vector<1x32x32xbf16>
    %18 = vector.shape_cast %17 : vector<1x32x32xbf16> to vector<32x32xbf16>
    %cst_15 = arith.constant dense<0.000000e+00> : vector<8x32xf32>
    %19 = tpu.matmul %5, %18, %cst_15 {dimension_numbers = #tpu.dot_dimension_numbers<[1], [0], [0], [1], [0, 0, 1, 1], [], []>} : vector<8x32xbf16>, vector<32x32xbf16>, vector<8x32xf32> -> vector<8x32xf32>
    %c1_16 = arith.constant 1 : index
    %c0_17 = arith.constant 0 : index
    %20 = vector.load %arg6[%c1_16, %c0_17] : memref<3x32xf32, #tpu.memory_space<vmem>>, vector<1x32xf32>
    %21 = vector.shape_cast %20 : vector<1x32xf32> to vector<32xf32>
    %22 = vector.shape_cast %21 : vector<32xf32> to vector<1x32xf32>
    %23 = vector.broadcast %22 : vector<1x32xf32> to vector<8x32xf32>
    %24 = arith.addf %19, %23 : vector<8x32xf32>
    %c2 = arith.constant 2 : index
    %c0_18 = arith.constant 0 : index
    %c0_19 = arith.constant 0 : index
    %25 = vector.load %arg5[%c2, %c0_18, %c0_19] : memref<3x32x32xbf16, #tpu.memory_space<vmem>>, vector<1x32x32xbf16>
    %26 = vector.shape_cast %25 : vector<1x32x32xbf16> to vector<32x32xbf16>
    %cst_20 = arith.constant dense<0.000000e+00> : vector<8x32xf32>
    %27 = tpu.matmul %8, %26, %cst_20 {dimension_numbers = #tpu.dot_dimension_numbers<[1], [0], [0], [1], [0, 0, 1, 1], [], []>} : vector<8x32xbf16>, vector<32x32xbf16>, vector<8x32xf32> -> vector<8x32xf32>
    %c2_21 = arith.constant 2 : index
    %c0_22 = arith.constant 0 : index
    %28 = vector.load %arg6[%c2_21, %c0_22] : memref<3x32xf32, #tpu.memory_space<vmem>>, vector<1x32xf32>
    %29 = vector.shape_cast %28 : vector<1x32xf32> to vector<32xf32>
    %30 = vector.shape_cast %29 : vector<32xf32> to vector<1x32xf32>
    %31 = vector.broadcast %30 : vector<1x32xf32> to vector<8x32xf32>
    %32 = arith.addf %27, %31 : vector<8x32xf32>
    %cst_23 = arith.constant 0.353553385 : f32
    %33 = vector.broadcast %cst_23 : f32 to vector<8x32xf32>
    %34 = arith.mulf %16, %33 : vector<8x32xf32>
    %35 = arith.truncf %34 : vector<8x32xf32> to vector<8x32xbf16>
    %36 = arith.truncf %24 : vector<8x32xf32> to vector<8x32xbf16>
    %37 = arith.truncf %32 : vector<8x32xf32> to vector<8x32xbf16>
    %c0_24 = arith.constant 0 : index
    %c0_25 = arith.constant 0 : index
    %c0_26 = arith.constant 0 : index
    %38 = vector.load %arg4[%c0_24, %c0_25, %c0_26] : memref<1x8x8xf32, #tpu.memory_space<vmem>>, vector<1x8x8xf32>
    %39 = vector.shape_cast %38 : vector<1x8x8xf32> to vector<8x8xf32>
    %cst_27 = arith.constant 0.000000e+00 : f32
    %40 = vector.broadcast %cst_27 : f32 to vector<8x8xf32>
    %41 = arith.cmpf oeq, %39, %40 : vector<8x8xf32>
    %42 = vector.extract_strided_slice %35 {offsets = [0, 0], sizes = [8, 8], strides = [1, 1]} : vector<8x32xbf16> to vector<8x8xbf16>
    %43 = vector.extract_strided_slice %36 {offsets = [0, 0], sizes = [8, 8], strides = [1, 1]} : vector<8x32xbf16> to vector<8x8xbf16>
    %44 = vector.extract_strided_slice %37 {offsets = [0, 0], sizes = [8, 8], strides = [1, 1]} : vector<8x32xbf16> to vector<8x8xbf16>
    %cst_28 = arith.constant dense<0.000000e+00> : vector<8x8xf32>
    %45 = tpu.matmul %42, %43, %cst_28 {dimension_numbers = #tpu.dot_dimension_numbers<[1], [1], [0], [0], [0, 0, 1, 0], [], []>} : vector<8x8xbf16>, vector<8x8xbf16>, vector<8x8xf32> -> vector<8x8xf32>
    %cst_29 = arith.constant -1.000000e+04 : f32
    %46 = vector.broadcast %cst_29 : f32 to vector<8x8xf32>
    %47 = arith.select %41, %46, %45 : vector<8x8xi1>, vector<8x8xf32>
    %cst_30 = arith.constant dense<0xFF800000> : vector<8xf32>
    %48 = vector.multi_reduction <maximumf>, %47, %cst_30 [1] : vector<8x8xf32> to vector<8xf32>
    %49 = vector.shape_cast %48 : vector<8xf32> to vector<8x1xf32>
    %50 = vector.broadcast %49 : vector<8x1xf32> to vector<8x8xf32>
    %51 = arith.subf %47, %50 : vector<8x8xf32>
    %52 = math.exp %51 : vector<8x8xf32>
    %cst_31 = arith.constant dense<0.000000e+00> : vector<8xf32>
    %53 = vector.multi_reduction <add>, %52, %cst_31 [1] : vector<8x8xf32> to vector<8xf32>
    %54 = vector.shape_cast %53 : vector<8xf32> to vector<8x1xf32>
    %55 = tpu.reciprocal %54 {approx = true} : vector<8x1xf32> -> vector<8x1xf32>
    %56 = vector.broadcast %55 : vector<8x1xf32> to vector<8x8xf32>
    %57 = arith.mulf %52, %56 : vector<8x8xf32>
    %58 = arith.truncf %57 : vector<8x8xf32> to vector<8x8xbf16>
    %cst_32 = arith.constant dense<0.000000e+00> : vector<8x8xf32>
    %59 = tpu.matmul %58, %44, %cst_32 {dimension_numbers = #tpu.dot_dimension_numbers<[1], [0], [0], [1], [0, 0, 1, 1], [], []>} : vector<8x8xbf16>, vector<8x8xbf16>, vector<8x8xf32> -> vector<8x8xf32>
    %60 = vector.extract_strided_slice %35 {offsets = [0, 8], sizes = [8, 8], strides = [1, 1]} : vector<8x32xbf16> to vector<8x8xbf16>
    %61 = vector.extract_strided_slice %36 {offsets = [0, 8], sizes = [8, 8], strides = [1, 1]} : vector<8x32xbf16> to vector<8x8xbf16>
    %62 = vector.extract_strided_slice %37 {offsets = [0, 8], sizes = [8, 8], strides = [1, 1]} : vector<8x32xbf16> to vector<8x8xbf16>
    %cst_33 = arith.constant dense<0.000000e+00> : vector<8x8xf32>
    %63 = tpu.matmul %60, %61, %cst_33 {dimension_numbers = #tpu.dot_dimension_numbers<[1], [1], [0], [0], [0, 0, 1, 0], [], []>} : vector<8x8xbf16>, vector<8x8xbf16>, vector<8x8xf32> -> vector<8x8xf32>
    %cst_34 = arith.constant -1.000000e+04 : f32
    %64 = vector.broadcast %cst_34 : f32 to vector<8x8xf32>
    %65 = arith.select %41, %64, %63 : vector<8x8xi1>, vector<8x8xf32>
    %cst_35 = arith.constant dense<0xFF800000> : vector<8xf32>
    %66 = vector.multi_reduction <maximumf>, %65, %cst_35 [1] : vector<8x8xf32> to vector<8xf32>
    %67 = vector.shape_cast %66 : vector<8xf32> to vector<8x1xf32>
    %68 = vector.broadcast %67 : vector<8x1xf32> to vector<8x8xf32>
    %69 = arith.subf %65, %68 : vector<8x8xf32>
    %70 = math.exp %69 : vector<8x8xf32>
    %cst_36 = arith.constant dense<0.000000e+00> : vector<8xf32>
    %71 = vector.multi_reduction <add>, %70, %cst_36 [1] : vector<8x8xf32> to vector<8xf32>
    %72 = vector.shape_cast %71 : vector<8xf32> to vector<8x1xf32>
    %73 = tpu.reciprocal %72 {approx = true} : vector<8x1xf32> -> vector<8x1xf32>
    %74 = vector.broadcast %73 : vector<8x1xf32> to vector<8x8xf32>
    %75 = arith.mulf %70, %74 : vector<8x8xf32>
    %76 = arith.truncf %75 : vector<8x8xf32> to vector<8x8xbf16>
    %cst_37 = arith.constant dense<0.000000e+00> : vector<8x8xf32>
    %77 = tpu.matmul %76, %62, %cst_37 {dimension_numbers = #tpu.dot_dimension_numbers<[1], [0], [0], [1], [0, 0, 1, 1], [], []>} : vector<8x8xbf16>, vector<8x8xbf16>, vector<8x8xf32> -> vector<8x8xf32>
    %78 = vector.extract_strided_slice %35 {offsets = [0, 16], sizes = [8, 8], strides = [1, 1]} : vector<8x32xbf16> to vector<8x8xbf16>
    %79 = vector.extract_strided_slice %36 {offsets = [0, 16], sizes = [8, 8], strides = [1, 1]} : vector<8x32xbf16> to vector<8x8xbf16>
    %80 = vector.extract_strided_slice %37 {offsets = [0, 16], sizes = [8, 8], strides = [1, 1]} : vector<8x32xbf16> to vector<8x8xbf16>
    %cst_38 = arith.constant dense<0.000000e+00> : vector<8x8xf32>
    %81 = tpu.matmul %78, %79, %cst_38 {dimension_numbers = #tpu.dot_dimension_numbers<[1], [1], [0], [0], [0, 0, 1, 0], [], []>} : vector<8x8xbf16>, vector<8x8xbf16>, vector<8x8xf32> -> vector<8x8xf32>
    %cst_39 = arith.constant -1.000000e+04 : f32
    %82 = vector.broadcast %cst_39 : f32 to vector<8x8xf32>
    %83 = arith.select %41, %82, %81 : vector<8x8xi1>, vector<8x8xf32>
    %cst_40 = arith.constant dense<0xFF800000> : vector<8xf32>
    %84 = vector.multi_reduction <maximumf>, %83, %cst_40 [1] : vector<8x8xf32> to vector<8xf32>
    %85 = vector.shape_cast %84 : vector<8xf32> to vector<8x1xf32>
    %86 = vector.broadcast %85 : vector<8x1xf32> to vector<8x8xf32>
    %87 = arith.subf %83, %86 : vector<8x8xf32>
    %88 = math.exp %87 : vector<8x8xf32>
    %cst_41 = arith.constant dense<0.000000e+00> : vector<8xf32>
    %89 = vector.multi_reduction <add>, %88, %cst_41 [1] : vector<8x8xf32> to vector<8xf32>
    %90 = vector.shape_cast %89 : vector<8xf32> to vector<8x1xf32>
    %91 = tpu.reciprocal %90 {approx = true} : vector<8x1xf32> -> vector<8x1xf32>
    %92 = vector.broadcast %91 : vector<8x1xf32> to vector<8x8xf32>
    %93 = arith.mulf %88, %92 : vector<8x8xf32>
    %94 = arith.truncf %93 : vector<8x8xf32> to vector<8x8xbf16>
    %cst_42 = arith.constant dense<0.000000e+00> : vector<8x8xf32>
    %95 = tpu.matmul %94, %80, %cst_42 {dimension_numbers = #tpu.dot_dimension_numbers<[1], [0], [0], [1], [0, 0, 1, 1], [], []>} : vector<8x8xbf16>, vector<8x8xbf16>, vector<8x8xf32> -> vector<8x8xf32>
    %96 = vector.extract_strided_slice %35 {offsets = [0, 24], sizes = [8, 8], strides = [1, 1]} : vector<8x32xbf16> to vector<8x8xbf16>
    %97 = vector.extract_strided_slice %36 {offsets = [0, 24], sizes = [8, 8], strides = [1, 1]} : vector<8x32xbf16> to vector<8x8xbf16>
    %98 = vector.extract_strided_slice %37 {offsets = [0, 24], sizes = [8, 8], strides = [1, 1]} : vector<8x32xbf16> to vector<8x8xbf16>
    %cst_43 = arith.constant dense<0.000000e+00> : vector<8x8xf32>
    %99 = tpu.matmul %96, %97, %cst_43 {dimension_numbers = #tpu.dot_dimension_numbers<[1], [1], [0], [0], [0, 0, 1, 0], [], []>} : vector<8x8xbf16>, vector<8x8xbf16>, vector<8x8xf32> -> vector<8x8xf32>
    %cst_44 = arith.constant -1.000000e+04 : f32
    %100 = vector.broadcast %cst_44 : f32 to vector<8x8xf32>
    %101 = arith.select %41, %100, %99 : vector<8x8xi1>, vector<8x8xf32>
    %cst_45 = arith.constant dense<0xFF800000> : vector<8xf32>
    %102 = vector.multi_reduction <maximumf>, %101, %cst_45 [1] : vector<8x8xf32> to vector<8xf32>
    %103 = vector.shape_cast %102 : vector<8xf32> to vector<8x1xf32>
    %104 = vector.broadcast %103 : vector<8x1xf32> to vector<8x8xf32>
    %105 = arith.subf %101, %104 : vector<8x8xf32>
    %106 = math.exp %105 : vector<8x8xf32>
    %cst_46 = arith.constant dense<0.000000e+00> : vector<8xf32>
    %107 = vector.multi_reduction <add>, %106, %cst_46 [1] : vector<8x8xf32> to vector<8xf32>
    %108 = vector.shape_cast %107 : vector<8xf32> to vector<8x1xf32>
    %109 = tpu.reciprocal %108 {approx = true} : vector<8x1xf32> -> vector<8x1xf32>
    %110 = vector.broadcast %109 : vector<8x1xf32> to vector<8x8xf32>
    %111 = arith.mulf %106, %110 : vector<8x8xf32>
    %112 = arith.truncf %111 : vector<8x8xf32> to vector<8x8xbf16>
    %cst_47 = arith.constant dense<0.000000e+00> : vector<8x8xf32>
    %113 = tpu.matmul %112, %98, %cst_47 {dimension_numbers = #tpu.dot_dimension_numbers<[1], [0], [0], [1], [0, 0, 1, 1], [], []>} : vector<8x8xbf16>, vector<8x8xbf16>, vector<8x8xf32> -> vector<8x8xf32>
    %114 = tpu.concatenate %59, %77, %95, %113 in 1 : vector<8x8xf32>, vector<8x8xf32>, vector<8x8xf32>, vector<8x8xf32> -> vector<8x32xf32>
    %115 = arith.truncf %114 : vector<8x32xf32> to vector<8x32xbf16>
    %c0_48 = arith.constant 0 : index
    %c0_49 = arith.constant 0 : index
    %116 = vector.load %arg7[%c0_48, %c0_49] : memref<32x32xbf16, #tpu.memory_space<vmem>>, vector<32x32xbf16>
    %cst_50 = arith.constant dense<0.000000e+00> : vector<8x32xf32>
    %117 = tpu.matmul %115, %116, %cst_50 {dimension_numbers = #tpu.dot_dimension_numbers<[1], [0], [0], [1], [0, 0, 1, 1], [], []>} : vector<8x32xbf16>, vector<32x32xbf16>, vector<8x32xf32> -> vector<8x32xf32>
    %c0_51 = arith.constant 0 : index
    %c0_52 = arith.constant 0 : index
    %118 = vector.load %arg8[%c0_51, %c0_52] : memref<1x32xf32, #tpu.memory_space<vmem>>, vector<1x32xf32>
    %119 = vector.broadcast %118 : vector<1x32xf32> to vector<8x32xf32>
    %120 = arith.addf %117, %119 : vector<8x32xf32>
    %c0_53 = arith.constant 0 : index
    %c0_54 = arith.constant 0 : index
    %c0_55 = arith.constant 0 : index
    %121 = vector.load %arg9[%c0_53, %c0_54, %c0_55] : memref<1x8x32xf32, #tpu.memory_space<vmem>>, vector<1x8x32xf32>
    %122 = vector.shape_cast %121 : vector<1x8x32xf32> to vector<8x32xf32>
    %123 = vector.shape_cast %120 : vector<8x32xf32> to vector<1x8x32xf32>
    tpu.vector_store %arg9[%c0_53, %c0_54, %c0_55], %123 {strides = array<i32>} : memref<1x8x32xf32, #tpu.memory_space<vmem>>, vector<1x8x32xf32>,
    return
  }
  func.func @transform_0(%arg0: i32) -> (i32, i32, i32) {
    %c0_i32 = arith.constant 0 : i32
    %c0_i32_0 = arith.constant 0 : i32
    %c0_i32_1 = arith.constant 0 : i32
    return %arg0, %c0_i32, %c0_i32_0 : i32, i32, i32
  }
  func.func @transform_1(%arg0: i32) -> (i32, i32, i32) {
    %c0_i32 = arith.constant 0 : i32
    %c0_i32_0 = arith.constant 0 : i32
    %c0_i32_1 = arith.constant 0 : i32
    return %arg0, %c0_i32, %c0_i32_0 : i32, i32, i32
  }
  func.func @transform_2(%arg0: i32) -> (i32, i32, i32) {
    %c0_i32 = arith.constant 0 : i32
    %c0_i32_0 = arith.constant 0 : i32
    %c0_i32_1 = arith.constant 0 : i32
    return %arg0, %c0_i32, %c0_i32_0 : i32, i32, i32
  }
  func.func @transform_3(%arg0: i32) -> (i32, i32, i32) {
    %c0_i32 = arith.constant 0 : i32
    %c0_i32_0 = arith.constant 0 : i32
    %c0_i32_1 = arith.constant 0 : i32
    return %arg0, %c0_i32, %c0_i32_0 : i32, i32, i32
  }
  func.func @transform_4(%arg0: i32) -> (i32, i32, i32) {
    %c0_i32 = arith.constant 0 : i32
    %c0_i32_0 = arith.constant 0 : i32
    %c0_i32_1 = arith.constant 0 : i32
    %c0_i32_2 = arith.constant 0 : i32
    return %c0_i32, %c0_i32_0, %c0_i32_1 : i32, i32, i32
  }
  func.func @transform_5(%arg0: i32) -> (i32, i32) {
    %c0_i32 = arith.constant 0 : i32
    %c0_i32_0 = arith.constant 0 : i32
    %c0_i32_1 = arith.constant 0 : i32
    return %c0_i32, %c0_i32_0 : i32, i32
  }
  func.func @transform_6(%arg0: i32) -> (i32, i32) {
    %c0_i32 = arith.constant 0 : i32
    %c0_i32_0 = arith.constant 0 : i32
    %c0_i32_1 = arith.constant 0 : i32
    return %c0_i32, %c0_i32_0 : i32, i32
  }
  func.func @transform_7(%arg0: i32) -> (i32, i32) {
    %c0_i32 = arith.constant 0 : i32
    %c0_i32_0 = arith.constant 0 : i32
    %c0_i32_1 = arith.constant 0 : i32
    return %c0_i32, %c0_i32_0 : i32, i32
  }
  func.func @transform_8(%arg0: i32) -> (i32, i32, i32) {
    %c0_i32 = arith.constant 0 : i32
    %c0_i32_0 = arith.constant 0 : i32
    %c0_i32_1 = arith.constant 0 : i32
    return %arg0, %c0_i32, %c0_i32_0 : i32, i32, i32
  }
}

</mosaic_0001>

<llo_original>
// kernel: tpu_custom_call.1
$region0: #{tpu_custom_call.1}
  #allocation0 [shape = 'u32[]', space=smem, size = 0x4, offset = 0x4, fixed_abs, tag = 'smem constant byte address 0x4 - core index']
  #allocation1 [shape = 'u32[144,128]{1,0:T(1,128)}', space=vmem, size = 0x12000, scoped, tag = 'internal scratch']
  %s0 = inlined_call_operand.hbm [shape: f32[2,8,32], index: 0, kind: input, shape index: {}]
  %s1 = inlined_call_operand.hbm [shape: f32[2,8,32], index: 1, kind: input, shape index: {}]
  %s2 = inlined_call_operand.hbm [shape: f32[2,8,32], index: 2, kind: input, shape index: {}]
  %s3 = inlined_call_operand.hbm [shape: f32[2,8,8], index: 3, kind: input, shape index: {}]
  %s4 = inlined_call_operand.hbm [shape: bf16[3,32,32], index: 4, kind: input, shape index: {}]
  %s5 = inlined_call_operand.vmem [shape: f32[3,32], index: 5, kind: input, shape index: {}]
  %s6 = inlined_call_operand.vmem [shape: bf16[32,32], index: 6, kind: input, shape index: {}]
  %s7 = inlined_call_operand.vmem [shape: f32[1,32], index: 7, kind: input, shape index: {}]
  %s8 = inlined_call_operand.hbm [shape: f32[2,8,32], index: 8, kind: output, shape index: {}]
  %s9 = sld [smem:[#allocation0]]
  $region85: #{tpu_custom_call.1} parent=0
    _
  %s11 = ssub.s32 1, %s9
  %s12 = scalar_select 0, %s11, %s9
  $region1: #{tpu_custom_call.1} parent=0
    #allocation2 [shape = 'u8[8192]{0}', space=vmem, size = 0x2000, scoped, tag = 'input window, operand 0']
    #allocation3 [shape = 's32[2]{0}', space=sflag, size = 0x8, scoped, tag = 'scoped memory for tpu_custom_call.1']
    #allocation4 [shape = 's32[2]{0}', space=sflag, size = 0x8, scoped, tag = 'scoped memory for tpu_custom_call.1']
    #allocation5 [shape = 'u8[8192]{0}', space=vmem, size = 0x2000, scoped, tag = 'input window, operand 1']
    #allocation6 [shape = 's32[2]{0}', space=sflag, size = 0x8, scoped, tag = 'scoped memory for tpu_custom_call.1']
    #allocation7 [shape = 'u8[8192]{0}', space=vmem, size = 0x2000, scoped, tag = 'input window, operand 2']
    #allocation8 [shape = 'u8[8192]{0}', space=vmem, size = 0x2000, scoped, tag = 'input window, operand 3']
    #allocation9 [shape = 's32[2]{0}', space=sflag, size = 0x8, scoped, tag = 'scoped memory for tpu_custom_call.1']
    #allocation10 [shape = 'u8[24576]{0}', space=vmem, size = 0x6000, scoped, tag = 'input window, operand 4, single buffered']
    #allocation11 [shape = 'u8[8192]{0}', space=vmem, size = 0x2000, scoped, tag = 'output window, operand 0']
    %13 = vsyncpa [#allocation3], 0
    %s14 = scalar_lea.sflag [#allocation3], 1
    %15 = vsyncpa %s14, 0
    %16 = vsyncpa [#allocation6], 0
    %s17 = scalar_lea.sflag [#allocation6], 1
    %18 = vsyncpa %s17, 0
    %19 = vsyncpa [#allocation9], 0
    %s20 = scalar_lea.sflag [#allocation9], 1
    %21 = vsyncpa %s20, 0
    %22 = vsyncpa [#allocation4], 0
    %s23 = scalar_lea.sflag [#allocation4], 1
    %24 = vsyncpa %s23, 0
    loop: start=0, step=1, limit=4
    $region2: #{tpu_custom_call.1} parent=1 // loop_pre_header
      _
    $region3: #{tpu_custom_call.1} parent=1 // loop_header
      %s26 = sphi 0, %s30
      %p27 = scmp.ge.s32.totalorder %s26, 4
      %s36 = sphi 0, %s38
      %s39 = sphi 0, %s36
      %s40 = sphi 0, %s39
      %s56 = sphi 0, %s40
      %s62 = sphi 0, %s64
      %s65 = sphi 0, %s62
      %s66 = sphi 0, %s65
      %s82 = sphi 0, %s66
      %s88 = sphi 0, %s90
      %s91 = sphi 0, %s88
      %s92 = sphi 0, %s91
      %s108 = sphi 0, %s92
      %s114 = sphi 0, %s116
      %s117 = sphi 0, %s114
      %s118 = sphi 0, %s117
      %s134 = sphi 0, %s118
      %s138 = sphi 0, %s138
      %s140 = sphi 0, %s138
      %s141 = sphi 0, %s140
      %s155 = sphi 0, %s141
      %s159 = sphi 0, %s159
      %s161 = sphi 0, %s159
      %s162 = sphi 0, %s161
      %s176 = sphi 0, %s162
      %s180 = sphi 0, %s180
      %s182 = sphi 0, %s180
      %s183 = sphi 0, %s182
      %s197 = sphi 0, %s183
      %s201 = sphi 0, %s201
      %s203 = sphi 0, %s201
      %s204 = sphi 0, %s203
      %s218 = sphi 0, %s204
      %s224 = sphi 0, %s226
      %s227 = sphi 0, %s224
      %s228 = sphi 0, %s227
      %s244 = sphi 0, %s228
    $region4: #{tpu_custom_call.1} parent=1 // loop_header_branch
      %29 = sbr.rel (%p27) target = $region8
    $region5: #{tpu_custom_call.1} parent=1 // loop_body
      %s31 = ssub.s32 %s26, 1
      %s32 = ssub.s32 %s26, 2
      %s33 = sadd.s32 %s26, 1
      %s34 = ssub.s32 %s26, %s33
      %p35 = scmp.eq.s32.totalorder %s34, 0
      %s37 = sadd.s32 %s36, 1
      %s38 = scalar_select %p35, %s36, %s37
      %p41 = pneg %p35
      %p42 = scmp.eq.s32.totalorder %s26, 1
      %p43 = por %p41, %p42
      %p44 = scmp.ne.s32.totalorder %s36, %s39
      %p45 = scmp.eq.s32.totalorder %s26, 0
      %p46 = por %p44, %p45
      %p47 = scmp.ne.s32.totalorder %s36, %s39
      %p48 = scmp.eq.s32.totalorder %s31, 1
      %p49 = por %p47, %p48
      %p50 = scmp.ne.s32.totalorder %s39, %s40
      %p51 = scmp.eq.s32.totalorder %s31, 0
      %p52 = por %p50, %p51
      %p53 = scmp.ne.s32.totalorder %s39, %s40
      %p54 = scmp.eq.s32.totalorder %s32, 1
      %p55 = por %p53, %p54
      %p57 = scmp.ne.s32.totalorder %s40, %s56
      %p58 = scmp.eq.s32.totalorder %s32, 0
      %p59 = por %p57, %p58
      %s60 = ssub.s32 %s26, %s33
      %p61 = scmp.eq.s32.totalorder %s60, 0
      %s63 = sadd.s32 %s62, 1
      %s64 = scalar_select %p61, %s62, %s63
      %p67 = pneg %p61
      %p68 = scmp.eq.s32.totalorder %s26, 1
      %p69 = por %p67, %p68
      %p70 = scmp.ne.s32.totalorder %s62, %s65
      %p71 = scmp.eq.s32.totalorder %s26, 0
      %p72 = por %p70, %p71
      %p73 = scmp.ne.s32.totalorder %s62, %s65
      %p74 = scmp.eq.s32.totalorder %s31, 1
      %p75 = por %p73, %p74
      %p76 = scmp.ne.s32.totalorder %s65, %s66
      %p77 = scmp.eq.s32.totalorder %s31, 0
      %p78 = por %p76, %p77
      %p79 = scmp.ne.s32.totalorder %s65, %s66
      %p80 = scmp.eq.s32.totalorder %s32, 1
      %p81 = por %p79, %p80
      %p83 = scmp.ne.s32.totalorder %s66, %s82
      %p84 = scmp.eq.s32.totalorder %s32, 0
      %p85 = por %p83, %p84
      %s86 = ssub.s32 %s26, %s33
      %p87 = scmp.eq.s32.totalorder %s86, 0
      %s89 = sadd.s32 %s88, 1
      %s90 = scalar_select %p87, %s88, %s89
      %p93 = pneg %p87
      %p94 = scmp.eq.s32.totalorder %s26, 1
      %p95 = por %p93, %p94
      %p96 = scmp.ne.s32.totalorder %s88, %s91
      %p97 = scmp.eq.s32.totalorder %s26, 0
      %p98 = por %p96, %p97
      %p99 = scmp.ne.s32.totalorder %s88, %s91
      %p100 = scmp.eq.s32.totalorder %s31, 1
      %p101 = por %p99, %p100
      %p102 = scmp.ne.s32.totalorder %s91, %s92
      %p103 = scmp.eq.s32.totalorder %s31, 0
      %p104 = por %p102, %p103
      %p105 = scmp.ne.s32.totalorder %s91, %s92
      %p106 = scmp.eq.s32.totalorder %s32, 1
      %p107 = por %p105, %p106
      %p109 = scmp.ne.s32.totalorder %s92, %s108
      %p110 = scmp.eq.s32.totalorder %s32, 0
      %p111 = por %p109, %p110
      %s112 = ssub.s32 %s26, %s33
      %p113 = scmp.eq.s32.totalorder %s112, 0
      %s115 = sadd.s32 %s114, 1
      %s116 = scalar_select %p113, %s114, %s115
      %p119 = pneg %p113
      %p120 = scmp.eq.s32.totalorder %s26, 1
      %p121 = por %p119, %p120
      %p122 = scmp.ne.s32.totalorder %s114, %s117
      %p123 = scmp.eq.s32.totalorder %s26, 0
      %p124 = por %p122, %p123
      %p125 = scmp.ne.s32.totalorder %s114, %s117
      %p126 = scmp.eq.s32.totalorder %s31, 1
      %p127 = por %p125, %p126
      %p128 = scmp.ne.s32.totalorder %s117, %s118
      %p129 = scmp.eq.s32.totalorder %s31, 0
      %p130 = por %p128, %p129
      %p131 = scmp.ne.s32.totalorder %s117, %s118
      %p132 = scmp.eq.s32.totalorder %s32, 1
      %p133 = por %p131, %p132
      %p135 = scmp.ne.s32.totalorder %s118, %s134
      %p136 = scmp.eq.s32.totalorder %s32, 0
      %p137 = por %p135, %p136
      %s139 = sadd.s32 %s138, 1
      %p142 = scmp.eq.s32.totalorder %s26, 1
      %p143 = scmp.ne.s32.totalorder %s138, %s140
      %p144 = scmp.eq.s32.totalorder %s26, 0
      %p145 = por %p143, %p144
      %p146 = scmp.ne.s32.totalorder %s138, %s140
      %p147 = scmp.eq.s32.totalorder %s31, 1
      %p148 = por %p146, %p147
      %p149 = scmp.ne.s32.totalorder %s140, %s141
      %p150 = scmp.eq.s32.totalorder %s31, 0
      %p151 = por %p149, %p150
      %p152 = scmp.ne.s32.totalorder %s140, %s141
      %p153 = scmp.eq.s32.totalorder %s32, 1
      %p154 = por %p152, %p153
      %p156 = scmp.ne.s32.totalorder %s141, %s155
      %p157 = scmp.eq.s32.totalorder %s32, 0
      %p158 = por %p156, %p157
      %s160 = sadd.s32 %s159, 1
      %p163 = scmp.eq.s32.totalorder %s26, 1
      %p164 = scmp.ne.s32.totalorder %s159, %s161
      %p165 = scmp.eq.s32.totalorder %s26, 0
      %p166 = por %p164, %p165
      %p167 = scmp.ne.s32.totalorder %s159, %s161
      %p168 = scmp.eq.s32.totalorder %s31, 1
      %p169 = por %p167, %p168
      %p170 = scmp.ne.s32.totalorder %s161, %s162
      %p171 = scmp.eq.s32.totalorder %s31, 0
      %p172 = por %p170, %p171
      %p173 = scmp.ne.s32.totalorder %s161, %s162
      %p174 = scmp.eq.s32.totalorder %s32, 1
      %p175 = por %p173, %p174
      %p177 = scmp.ne.s32.totalorder %s162, %s176
      %p178 = scmp.eq.s32.totalorder %s32, 0
      %p179 = por %p177, %p178
      %s181 = sadd.s32 %s180, 1
      %p184 = scmp.eq.s32.totalorder %s26, 1
      %p185 = scmp.ne.s32.totalorder %s180, %s182
      %p186 = scmp.eq.s32.totalorder %s26, 0
      %p187 = por %p185, %p186
      %p188 = scmp.ne.s32.totalorder %s180, %s182
      %p189 = scmp.eq.s32.totalorder %s31, 1
      %p190 = por %p188, %p189
      %p191 = scmp.ne.s32.totalorder %s182, %s183
      %p192 = scmp.eq.s32.totalorder %s31, 0
      %p193 = por %p191, %p192
      %p194 = scmp.ne.s32.totalorder %s182, %s183
      %p195 = scmp.eq.s32.totalorder %s32, 1
      %p196 = por %p194, %p195
      %p198 = scmp.ne.s32.totalorder %s183, %s197
      %p199 = scmp.eq.s32.totalorder %s32, 0
      %p200 = por %p198, %p199
      %s202 = sadd.s32 %s201, 1
      %p205 = scmp.eq.s32.totalorder %s26, 1
      %p206 = scmp.ne.s32.totalorder %s201, %s203
      %p207 = scmp.eq.s32.totalorder %s26, 0
      %p208 = por %p206, %p207
      %p209 = scmp.ne.s32.totalorder %s201, %s203
      %p210 = scmp.eq.s32.totalorder %s31, 1
      %p211 = por %p209, %p210
      %p212 = scmp.ne.s32.totalorder %s203, %s204
      %p213 = scmp.eq.s32.totalorder %s31, 0
      %p214 = por %p212, %p213
      %p215 = scmp.ne.s32.totalorder %s203, %s204
      %p216 = scmp.eq.s32.totalorder %s32, 1
      %p217 = por %p215, %p216
      %p219 = scmp.ne.s32.totalorder %s204, %s218
      %p220 = scmp.eq.s32.totalorder %s32, 0
      %p221 = por %p219, %p220
      %s222 = ssub.s32 %s26, %s33
      %p223 = scmp.eq.s32.totalorder %s222, 0
      %s225 = sadd.s32 %s224, 1
      %s226 = scalar_select %p223, %s224, %s225
      %p229 = pneg %p223
      %p230 = scmp.eq.s32.totalorder %s26, 1
      %p231 = por %p229, %p230
      %p232 = scmp.ne.s32.totalorder %s224, %s227
      %p233 = scmp.eq.s32.totalorder %s26, 0
      %p234 = por %p232, %p233
      %p235 = scmp.ne.s32.totalorder %s224, %s227
      %p236 = scmp.eq.s32.totalorder %s31, 1
      %p237 = por %p235, %p236
      %p238 = scmp.ne.s32.totalorder %s227, %s228
      %p239 = scmp.eq.s32.totalorder %s31, 0
      %p240 = por %p238, %p239
      %p241 = scmp.ne.s32.totalorder %s227, %s228
      %p242 = scmp.eq.s32.totalorder %s32, 1
      %p243 = por %p241, %p242
      %p245 = scmp.ne.s32.totalorder %s228, %s244
      %p246 = scmp.eq.s32.totalorder %s32, 0
      %p247 = por %p245, %p246
      %p248 = scmp.le.s32.totalorder 1, %s26
      %p249 = scmp.lt.s32.totalorder %s26, 3
      %p250 = pnand %p248, %p249
      %p251 = pneg %p250
      // Predicated region
      $region9: #{tpu_custom_call.1} parent=5 // pred_check
        _
      $region10: #{tpu_custom_call.1} parent=5 // pred_check_branch
        %253 = sbr.rel (%p250) target = $region12
      $region11: #{tpu_custom_call.1} parent=5 // pred_region
        %s254 = ssub.s32 %s26, 1
        // Predicated region
        $region13: #{tpu_custom_call.1} parent=11 // pred_check
          %p255 = pneg %p151
        $region14: #{tpu_custom_call.1} parent=11 // pred_check_branch
          %257 = sbr.rel (%p255) target = $region16
        $region15: #{tpu_custom_call.1} parent=11 // pred_region
          %s259 = ssub.s32 768, 768
          %260 = vsyncadd [#allocation9], %s259
          %s261 = sshll.u32 [#allocation10], 4
          %s262 = int_to_ptr.vmem [resolvable:$true] %s261
          %267 = dma.hbm_to_vmem [thread:$0]  %s4, 768, %s262, [#allocation9], 64, 64, 4
        $region16: #{tpu_custom_call.1} parent=11 // pred_fallthru
          _
        // Predicated region
        $region17: #{tpu_custom_call.1} parent=11 // pred_check
          %p268 = pneg %p172
        $region18: #{tpu_custom_call.1} parent=11 // pred_check_branch
          %270 = sbr.rel (%p268) target = $region20
        $region19: #{tpu_custom_call.1} parent=11 // pred_region
          _
        $region20: #{tpu_custom_call.1} parent=11 // pred_fallthru
          _
        // Predicated region
        $region21: #{tpu_custom_call.1} parent=11 // pred_check
          %p271 = pneg %p193
        $region22: #{tpu_custom_call.1} parent=11 // pred_check_branch
          %273 = sbr.rel (%p271) target = $region24
        $region23: #{tpu_custom_call.1} parent=11 // pred_region
          _
        $region24: #{tpu_custom_call.1} parent=11 // pred_fallthru
          _
        // Predicated region
        $region25: #{tpu_custom_call.1} parent=11 // pred_check
          %p274 = pneg %p214
        $region26: #{tpu_custom_call.1} parent=11 // pred_check_branch
          %276 = sbr.rel (%p274) target = $region28
        $region27: #{tpu_custom_call.1} parent=11 // pred_region
          _
        $region28: #{tpu_custom_call.1} parent=11 // pred_fallthru
          _
      $region12: #{tpu_custom_call.1} parent=5 // pred_fallthru
        _
      %p277 = scmp.lt.s32.totalorder %s26, 2
      // Predicated region
      $region29: #{tpu_custom_call.1} parent=5 // pred_check
        %p278 = pneg %p277
      $region30: #{tpu_custom_call.1} parent=5 // pred_check_branch
        %280 = sbr.rel (%p278) target = $region32
      $region31: #{tpu_custom_call.1} parent=5 // pred_region
        // Predicated region
        $region33: #{tpu_custom_call.1} parent=31 // pred_check
          %p281 = pneg %p46
        $region34: #{tpu_custom_call.1} parent=31 // pred_check_branch
          %283 = sbr.rel (%p281) target = $region36
        $region35: #{tpu_custom_call.1} parent=31 // pred_region
          %s284 = sand.u32 %s36, 1
          %s285 = scalar_lea.sflag [#allocation3], %s284
          %s286 = sand.u32 %s36, 1
          %s287 = smul.addr %s286, 8
          %s288 = scalar_lea.vmem [#allocation2], %s287
          %s290 = ssub.s32 128, 128
          %291 = vsyncadd %s285, %s290
          %s292 = smul.addr %s26, 128
          %s293 = scalar_lea.hbm %s0, %s292
          %s295 = sshll.u32 %s288, 4
          %s296 = int_to_ptr.vmem [resolvable:$true] %s295
          %298 = dma.hbm_to_vmem [thread:$0]  %s293, 128, %s296, %s285
        $region36: #{tpu_custom_call.1} parent=31 // pred_fallthru
          _
        // Predicated region
        $region37: #{tpu_custom_call.1} parent=31 // pred_check
          %p299 = pneg %p72
        $region38: #{tpu_custom_call.1} parent=31 // pred_check_branch
          %301 = sbr.rel (%p299) target = $region40
        $region39: #{tpu_custom_call.1} parent=31 // pred_region
          %s302 = sand.u32 %s26, 1
          %s303 = scalar_lea.sflag [#allocation6], %s302
          %s304 = sand.u32 %s62, 1
          %s305 = smul.addr %s304, 8
          %s306 = scalar_lea.vmem [#allocation5], %s305
          %s308 = ssub.s32 128, 128
          %309 = vsyncadd %s303, %s308
          %s310 = smul.addr %s26, 128
          %s311 = scalar_lea.hbm %s1, %s310
          %s313 = sshll.u32 %s306, 4
          %s314 = int_to_ptr.vmem [resolvable:$true] %s313
          %316 = dma.hbm_to_vmem [thread:$0]  %s311, 128, %s314, %s303
        $region40: #{tpu_custom_call.1} parent=31 // pred_fallthru
          _
        // Predicated region
        $region41: #{tpu_custom_call.1} parent=31 // pred_check
          %p317 = pneg %p98
        $region42: #{tpu_custom_call.1} parent=31 // pred_check_branch
          %319 = sbr.rel (%p317) target = $region44
        $region43: #{tpu_custom_call.1} parent=31 // pred_region
          %s320 = sand.u32 %s26, 1
          %s321 = scalar_lea.sflag [#allocation6], %s320
          %s322 = sand.u32 %s88, 1
          %s323 = smul.addr %s322, 8
          %s324 = scalar_lea.vmem [#allocation7], %s323
          %s326 = ssub.s32 128, 128
          %327 = vsyncadd %s321, %s326
          %s328 = smul.addr %s26, 128
          %s329 = scalar_lea.hbm %s2, %s328
          %s331 = sshll.u32 %s324, 4
          %s332 = int_to_ptr.vmem [resolvable:$true] %s331
          %334 = dma.hbm_to_vmem [thread:$0]  %s329, 128, %s332, %s321
        $region44: #{tpu_custom_call.1} parent=31 // pred_fallthru
          _
        // Predicated region
        $region45: #{tpu_custom_call.1} parent=31 // pred_check
          %p335 = pneg %p124
        $region46: #{tpu_custom_call.1} parent=31 // pred_check_branch
          %337 = sbr.rel (%p335) target = $region48
        $region47: #{tpu_custom_call.1} parent=31 // pred_region
          %s338 = sand.u32 %s26, 1
          %s339 = scalar_lea.sflag [#allocation9], %s338
          %s340 = sand.u32 %s114, 1
          %s341 = smul.addr %s340, 8
          %s342 = scalar_lea.vmem [#allocation8], %s341
          %s344 = ssub.s32 128, 128
          %345 = vsyncadd %s339, %s344
          %s346 = smul.addr %s26, 128
          %s347 = scalar_lea.hbm %s3, %s346
          %s349 = sshll.u32 %s342, 4
          %s350 = int_to_ptr.vmem [resolvable:$true] %s349
          %352 = dma.hbm_to_vmem [thread:$0]  %s347, 128, %s350, %s339
        $region48: #{tpu_custom_call.1} parent=31 // pred_fallthru
          _
      $region32: #{tpu_custom_call.1} parent=5 // pred_fallthru
        _
      %p353 = scmp.le.s32.totalorder 1, %s26
      %p354 = scmp.lt.s32.totalorder %s26, 3
      %p355 = pnand %p353, %p354
      %p356 = pneg %p355
      // Predicated region
      $region49: #{tpu_custom_call.1} parent=5 // pred_check
        _
      $region50: #{tpu_custom_call.1} parent=5 // pred_check_branch
        %358 = sbr.rel (%p355) target = $region52
      $region51: #{tpu_custom_call.1} parent=5 // pred_region
        %s359 = ssub.s32 %s26, 1
        %s360 = sand.u32 %s39, 1
        %s361 = scalar_lea.sflag [#allocation3], %s360
        %s362 = sand.u32 %s39, 1
        %s363 = smul.addr %s362, 8
        %s364 = scalar_lea.vmem [#allocation2], %s363
        // Predicated region
        $region53: #{tpu_custom_call.1} parent=51 // pred_check
          %p365 = pneg %p52
        $region54: #{tpu_custom_call.1} parent=51 // pred_check_branch
          %367 = sbr.rel (%p365) target = $region56
        $region55: #{tpu_custom_call.1} parent=51 // pred_region
          %368 = dma.done %s361, 128
        $region56: #{tpu_custom_call.1} parent=51 // pred_fallthru
          _
        %s369 = sand.u32 %s31, 1
        %s370 = scalar_lea.sflag [#allocation6], %s369
        %s371 = sand.u32 %s65, 1
        %s372 = smul.addr %s371, 8
        %s373 = scalar_lea.vmem [#allocation5], %s372
        // Predicated region
        $region57: #{tpu_custom_call.1} parent=51 // pred_check
          %p374 = pneg %p78
        $region58: #{tpu_custom_call.1} parent=51 // pred_check_branch
          %376 = sbr.rel (%p374) target = $region60
        $region59: #{tpu_custom_call.1} parent=51 // pred_region
          %377 = dma.done %s370, 128
        $region60: #{tpu_custom_call.1} parent=51 // pred_fallthru
          _
        %s378 = sand.u32 %s31, 1
        %s379 = scalar_lea.sflag [#allocation6], %s378
        %s380 = sand.u32 %s91, 1
        %s381 = smul.addr %s380, 8
        %s382 = scalar_lea.vmem [#allocation7], %s381
        // Predicated region
        $region61: #{tpu_custom_call.1} parent=51 // pred_check
          %p383 = pneg %p104
        $region62: #{tpu_custom_call.1} parent=51 // pred_check_branch
          %385 = sbr.rel (%p383) target = $region64
        $region63: #{tpu_custom_call.1} parent=51 // pred_region
          %386 = dma.done %s379, 128
        $region64: #{tpu_custom_call.1} parent=51 // pred_fallthru
          _
        %s387 = sand.u32 %s31, 1
        %s388 = scalar_lea.sflag [#allocation9], %s387
        %s389 = sand.u32 %s117, 1
        %s390 = smul.addr %s389, 8
        %s391 = scalar_lea.vmem [#allocation8], %s390
        // Predicated region
        $region65: #{tpu_custom_call.1} parent=51 // pred_check
          %p392 = pneg %p130
        $region66: #{tpu_custom_call.1} parent=51 // pred_check_branch
          %394 = sbr.rel (%p392) target = $region68
        $region67: #{tpu_custom_call.1} parent=51 // pred_region
          %395 = dma.done %s388, 128
        $region68: #{tpu_custom_call.1} parent=51 // pred_fallthru
          _
        // Predicated region
        $region69: #{tpu_custom_call.1} parent=51 // pred_check
          %p396 = pneg %p151
        $region70: #{tpu_custom_call.1} parent=51 // pred_check_branch
          %398 = sbr.rel (%p396) target = $region72
        $region71: #{tpu_custom_call.1} parent=51 // pred_region
          %399 = dma.done [#allocation9], 768
        $region72: #{tpu_custom_call.1} parent=51 // pred_fallthru
          _
        %s400 = sand.u32 %s39, 1
        %s401 = scalar_lea.sflag [#allocation3], %s400
        %s402 = sand.u32 %s39, 1
        %s403 = smul.addr %s402, 8
        %s404 = scalar_lea.vmem [#allocation2], %s403
        %p405 = pneg %p52
        %p406 = pneg %p49
        %s407 = sand.u32 %s31, 1
        %s408 = scalar_lea.sflag [#allocation6], %s407
        %s409 = sand.u32 %s65, 1
        %s410 = smul.addr %s409, 8
        %s411 = scalar_lea.vmem [#allocation5], %s410
        %p412 = pneg %p78
        %p413 = pneg %p75
        %s414 = sand.u32 %s31, 1
        %s415 = scalar_lea.sflag [#allocation6], %s414
        %s416 = sand.u32 %s91, 1
        %s417 = smul.addr %s416, 8
        %s418 = scalar_lea.vmem [#allocation7], %s417
        %p419 = pneg %p104
        %p420 = pneg %p101
        %s421 = sand.u32 %s31, 1
        %s422 = scalar_lea.sflag [#allocation9], %s421
        %s423 = sand.u32 %s117, 1
        %s424 = smul.addr %s423, 8
        %s425 = scalar_lea.vmem [#allocation8], %s424
        %p426 = pneg %p130
        %p427 = pneg %p127
        %p428 = pneg %p151
        %p429 = pneg %p148
        %p430 = pneg %p172
        %p431 = pneg %p169
        %p432 = pneg %p193
        %p433 = pneg %p190
        %p434 = pneg %p214
        %p435 = pneg %p211
        %p436 = pneg %p240
        %p437 = pneg %p237
        %s438 = sand.u32 %s227, 1
        %s439 = scalar_lea.sflag [#allocation4], %s438
        %s440 = sand.u32 %s227, 1
        %s441 = smul.addr %s440, 8
        %s442 = scalar_lea.vmem [#allocation11], %s441
        %v444 = vld [vmem:[%s364] sm:$0xff]
        %v445 = vpack.c.bf16 %v444, %v444
        %v446 = vld [vmem:[%s373] sm:$0xff]
        %v447 = vpack.c.bf16 %v446, %v446
        %v448 = vld [vmem:[%s382] sm:$0xff]
        %v449 = vpack.c.bf16 %v448, %v448
        %v450 = vld [vmem:[#allocation10] sm:$0xf]
        %v451 = vld [vmem:[#allocation10 + $0x4] sm:$0xf]
        %v452 = vld [vmem:[#allocation10 + $0x8] sm:$0xf]
        %v453 = vld [vmem:[#allocation10 + $0xc] sm:$0xf]
        %v454 = vld [vmem:[%s5] sm:$0x1]
        %v455 = vlaneseq
        %v456 = vshrl.u32 %v455, 7
        %v457 = vsub.s32 0, %v456
        %v458 = vrot.slane %v454, %v457
        %v463 = vunpack.c.l.b16 %v450
        %v464 = vunpack.c.l.b16 %v451
        %v465 = vunpack.c.l.b16 %v452
        %v466 = vunpack.c.l.b16 %v453
        %v467 = vpack.c.b16 %v464, %v463
        %v468 = vpack.c.b16 %v466, %v465
        %vm471 = vcmask 261120
        %v473 = vsel %vm471, %v445, 0
        %475 = vmatprep.subr.bf16.mxu0 0
        %476 = vmatpush1.bf16.msra.mxu0 %v467
        %477 = vmatprep.subr.bf16.mxu0 0
        %478 = vmatpush1.bf16.msra.mxu0 %v468
        %479 = vmatprep.subr.bf16.mxu0 0
        %480 = vmatpush1.bf16.msra.mxu0 0
        %481 = vmatprep.subr.bf16.mxu0 0
        %482 = vmatpush1.bf16.msra.mxu0 0
        %483 = vmatprep.subr.bf16.mxu0 0
        %484 = vmatpush1.bf16.msra.mxu0 0
        %485 = vmatprep.subr.bf16.mxu0 0
        %486 = vmatpush1.bf16.msra.mxu0 0
        %487 = vmatprep.subr.bf16.mxu0 0
        %488 = vmatpush1.bf16.msra.mxu0 0
        %489 = vmatprep.subr.bf16.mxu0 0
        %490 = vmatpush1.bf16.msra.mxu0 0
        %491 = vmatprep.subr.bf16.mxu0 0
        %492 = vmatpush1.bf16.msra.mxu0 0
        %493 = vmatprep.subr.bf16.mxu0 0
        %494 = vmatpush1.bf16.msra.mxu0 0
        %495 = vmatprep.subr.bf16.mxu0 0
        %496 = vmatpush1.bf16.msra.mxu0 0
        %497 = vmatprep.subr.bf16.mxu0 0
        %498 = vmatpush1.bf16.msra.mxu0 0
        %499 = vmatprep.subr.bf16.mxu0 0
        %500 = vmatpush1.bf16.msra.mxu0 0
        %501 = vmatprep.subr.bf16.mxu0 0
        %502 = vmatpush1.bf16.msra.mxu0 0
        %503 = vmatprep.subr.bf16.mxu0 0
        %504 = vmatpush1.bf16.msra.mxu0 0
        %505 = vmatprep.subr.bf16.mxu0 0
        %506 = vmatpush1.bf16.msra.mxu0 0
        %507 = vmatprep.mubr.bf16.mxu0 0
        %508 = vmatmul.mubr.bf16.gmra.mrb[0].mxu0 %v473
        %v509 = vpop.f32.mrb[0].mxu0
        %v510 = vadd.f32 %v458, %v509
        %v511 = vpop.f32.mrb[0].mxu0
        %v512 = vpop.f32.mrb[0].mxu0
        %v513 = vpop.f32.mrb[0].mxu0
        %514 = vdwg.mxu0
        %s515 = scalar_lea.vmem [#allocation10], 16
        %v516 = vld [vmem:[%s515] sm:$0xf]
        %v517 = vld [vmem:[%s515 + $0x4] sm:$0xf]
        %v518 = vld [vmem:[%s515 + $0x8] sm:$0xf]
        %v519 = vld [vmem:[%s515 + $0xc] sm:$0xf]
        %v520 = vld [vmem:[%s5 + $0x1] sm:$0x1]
        %v521 = vlaneseq
        %v522 = vshrl.u32 %v521, 7
        %v523 = vsub.s32 0, %v522
        %v524 = vrot.slane %v520, %v523
        %v529 = vunpack.c.l.b16 %v516
        %v530 = vunpack.c.l.b16 %v517
        %v531 = vunpack.c.l.b16 %v518
        %v532 = vunpack.c.l.b16 %v519
        %v533 = vpack.c.b16 %v530, %v529
        %v534 = vpack.c.b16 %v532, %v531
        %v538 = vsel %vm471, %v447, 0
        %540 = vmatprep.subr.bf16.mxu0 0
        %541 = vmatpush1.bf16.msra.mxu0 %v533
        %542 = vmatprep.subr.bf16.mxu0 0
        %543 = vmatpush1.bf16.msra.mxu0 %v534
        %544 = vmatprep.subr.bf16.mxu0 0
        %545 = vmatpush1.bf16.msra.mxu0 0
        %546 = vmatprep.subr.bf16.mxu0 0
        %547 = vmatpush1.bf16.msra.mxu0 0
        %548 = vmatprep.subr.bf16.mxu0 0
        %549 = vmatpush1.bf16.msra.mxu0 0
        %550 = vmatprep.subr.bf16.mxu0 0
        %551 = vmatpush1.bf16.msra.mxu0 0
        %552 = vmatprep.subr.bf16.mxu0 0
        %553 = vmatpush1.bf16.msra.mxu0 0
        %554 = vmatprep.subr.bf16.mxu0 0
        %555 = vmatpush1.bf16.msra.mxu0 0
        %556 = vmatprep.subr.bf16.mxu0 0
        %557 = vmatpush1.bf16.msra.mxu0 0
        %558 = vmatprep.subr.bf16.mxu0 0
        %559 = vmatpush1.bf16.msra.mxu0 0
        %560 = vmatprep.subr.bf16.mxu0 0
        %561 = vmatpush1.bf16.msra.mxu0 0
        %562 = vmatprep.subr.bf16.mxu0 0
        %563 = vmatpush1.bf16.msra.mxu0 0
        %564 = vmatprep.subr.bf16.mxu0 0
        %565 = vmatpush1.bf16.msra.mxu0 0
        %566 = vmatprep.subr.bf16.mxu0 0
        %567 = vmatpush1.bf16.msra.mxu0 0
        %568 = vmatprep.subr.bf16.mxu0 0
        %569 = vmatpush1.bf16.msra.mxu0 0
        %570 = vmatprep.subr.bf16.mxu0 0
        %571 = vmatpush1.bf16.msra.mxu0 0
        %572 = vmatprep.mubr.bf16.mxu0 0
        %573 = vmatmul.mubr.bf16.gmra.mrb[0].mxu0 %v538
        %v574 = vpop.f32.mrb[0].mxu0
        %v575 = vadd.f32 %v524, %v574
        %v576 = vpop.f32.mrb[0].mxu0
        %v577 = vpop.f32.mrb[0].mxu0
        %v578 = vpop.f32.mrb[0].mxu0
        %579 = vdwg.mxu0
        %s580 = scalar_lea.vmem [#allocation10], 32
        %v581 = vld [vmem:[%s580] sm:$0xf]
        %v582 = vld [vmem:[%s580 + $0x4] sm:$0xf]
        %v583 = vld [vmem:[%s580 + $0x8] sm:$0xf]
        %v584 = vld [vmem:[%s580 + $0xc] sm:$0xf]
        %v585 = vld [vmem:[%s5 + $0x2] sm:$0x1]
        %v586 = vlaneseq
        %v587 = vshrl.u32 %v586, 7
        %v588 = vsub.s32 0, %v587
        %v589 = vrot.slane %v585, %v588
        %v594 = vunpack.c.l.b16 %v581
        %v595 = vunpack.c.l.b16 %v582
        %v596 = vunpack.c.l.b16 %v583
        %v597 = vunpack.c.l.b16 %v584
        %v598 = vpack.c.b16 %v595, %v594
        %v599 = vpack.c.b16 %v597, %v596
        %v603 = vsel %vm471, %v449, 0
        %605 = vmatprep.subr.bf16.mxu0 0
        %606 = vmatpush1.bf16.msra.mxu0 %v598
        %607 = vmatprep.subr.bf16.mxu0 0
        %608 = vmatpush1.bf16.msra.mxu0 %v599
        %609 = vmatprep.subr.bf16.mxu0 0
        %610 = vmatpush1.bf16.msra.mxu0 0
        %611 = vmatprep.subr.bf16.mxu0 0
        %612 = vmatpush1.bf16.msra.mxu0 0
        %613 = vmatprep.subr.bf16.mxu0 0
        %614 = vmatpush1.bf16.msra.mxu0 0
        %615 = vmatprep.subr.bf16.mxu0 0
        %616 = vmatpush1.bf16.msra.mxu0 0
        %617 = vmatprep.subr.bf16.mxu0 0
        %618 = vmatpush1.bf16.msra.mxu0 0
        %619 = vmatprep.subr.bf16.mxu0 0
        %620 = vmatpush1.bf16.msra.mxu0 0
        %621 = vmatprep.subr.bf16.mxu0 0
        %622 = vmatpush1.bf16.msra.mxu0 0
        %623 = vmatprep.subr.bf16.mxu0 0
        %624 = vmatpush1.bf16.msra.mxu0 0
        %625 = vmatprep.subr.bf16.mxu0 0
        %626 = vmatpush1.bf16.msra.mxu0 0
        %627 = vmatprep.subr.bf16.mxu0 0
        %628 = vmatpush1.bf16.msra.mxu0 0
        %629 = vmatprep.subr.bf16.mxu0 0
        %630 = vmatpush1.bf16.msra.mxu0 0
        %631 = vmatprep.subr.bf16.mxu0 0
        %632 = vmatpush1.bf16.msra.mxu0 0
        %633 = vmatprep.subr.bf16.mxu0 0
        %634 = vmatpush1.bf16.msra.mxu0 0
        %635 = vmatprep.subr.bf16.mxu0 0
        %636 = vmatpush1.bf16.msra.mxu0 0
        %637 = vmatprep.mubr.bf16.mxu0 0
        %638 = vmatmul.mubr.bf16.gmra.mrb[0].mxu0 %v603
        %v639 = vpop.f32.mrb[0].mxu0
        %v640 = vadd.f32 %v589, %v639
        %v641 = vpop.f32.mrb[0].mxu0
        %v642 = vpop.f32.mrb[0].mxu0
        %v643 = vpop.f32.mrb[0].mxu0
        %644 = vdwg.mxu0
        %v645 = vmul.f32 %v510, 0.35355338
        %v646 = vpack.c.bf16 %v645, %v645
        %v647 = vpack.c.bf16 %v575, %v575
        %v648 = vpack.c.bf16 %v640, %v640
        %v649 = vld [vmem:[%s391] sm:$0xff]
        %vm650 = vcmp.eq.f32.partialorder %v649, 0.0
        %vm651 = vcmask 64512
        %v653 = vsel %vm651, %v646, 0
        %v656 = vsel %vm651, %v647, 0
        %658 = vmatprep.subr.bf16.mxu0 0
        %659 = vmatpush1.bf16.xpose.msra.mxu0 %v656
        %660 = vmatprep.subr.bf16.mxu0 0
        %661 = vmatpush1.bf16.xpose.msra.mxu0 0
        %662 = vmatprep.subr.bf16.mxu0 0
        %663 = vmatpush1.bf16.xpose.msra.mxu0 0
        %664 = vmatprep.subr.bf16.mxu0 0
        %665 = vmatpush1.bf16.xpose.msra.mxu0 0
        %666 = vmatprep.subr.bf16.mxu0 0
        %667 = vmatpush1.bf16.xpose.msra.mxu0 0
        %668 = vmatprep.subr.bf16.mxu0 0
        %669 = vmatpush1.bf16.xpose.msra.mxu0 0
        %670 = vmatprep.subr.bf16.mxu0 0
        %671 = vmatpush1.bf16.xpose.msra.mxu0 0
        %672 = vmatprep.subr.bf16.mxu0 0
        %673 = vmatpush1.bf16.xpose.msra.mxu0 0
        %674 = vmatprep.subr.bf16.mxu0 0
        %675 = vmatpush1.bf16.xpose.msra.mxu0 0
        %676 = vmatprep.subr.bf16.mxu0 0
        %677 = vmatpush1.bf16.xpose.msra.mxu0 0
        %678 = vmatprep.subr.bf16.mxu0 0
        %679 = vmatpush1.bf16.xpose.msra.mxu0 0
        %680 = vmatprep.subr.bf16.mxu0 0
        %681 = vmatpush1.bf16.xpose.msra.mxu0 0
        %682 = vmatprep.subr.bf16.mxu0 0
        %683 = vmatpush1.bf16.xpose.msra.mxu0 0
        %684 = vmatprep.subr.bf16.mxu0 0
        %685 = vmatpush1.bf16.xpose.msra.mxu0 0
        %686 = vmatprep.subr.bf16.mxu0 0
        %687 = vmatpush1.bf16.xpose.msra.mxu0 0
        %688 = vmatprep.subr.bf16.mxu0 0
        %689 = vmatpush1.bf16.xpose.msra.mxu0 0
        %690 = vmatprep.mubr.bf16.mxu0 0
        %691 = vmatmul.mubr.bf16.gmra.mrb[0].mxu0 %v653
        %v692 = vpop.f32.mrb[0].mxu0
        %v693 = vadd.f32 0.0, %v692
        %v694 = vpop.f32.mrb[0].mxu0
        %v695 = vpop.f32.mrb[0].mxu0
        %v696 = vpop.f32.mrb[0].mxu0
        %697 = vdwg.mxu0
        %v698 = vsel %vm650, -10000.0, %v693
        %v699 = vsel %vm651, %v698, -inf
        %700 = vmax.xlane.f32.xlu0 %v699
        %v701 = vpop.xlane.xlu0 %700
        %v702 = vsub.f32 %v698, %v701
        %v703 = vmul.f32 %v702, 1.442695
        %v704 = vpow.pop %v703
        %v705 = vsel %vm651, %v704, 0.0
        %706 = vadd.xlane.f32.xlu0 %v705
        %v707 = vpop.xlane.xlu0 %706
        %v708 = vrcp.pop %v707
        %v709 = vmul.f32 %v704, %v708
        %v710 = vpack.c.bf16 %v709, %v709
        %v712 = vsel %vm651, %v710, 0
        %vm714 = vcmask 1043456
        %v716 = vsel %vm714, %v648, 0
        %718 = vmatprep.subr.bf16.mxu0 0
        %719 = vmatpush1.bf16.msra.mxu0 %v716
        %720 = vmatprep.subr.bf16.mxu0 0
        %721 = vmatpush1.bf16.msra.mxu0 0
        %722 = vmatprep.subr.bf16.mxu0 0
        %723 = vmatpush1.bf16.msra.mxu0 0
        %724 = vmatprep.subr.bf16.mxu0 0
        %725 = vmatpush1.bf16.msra.mxu0 0
        %726 = vmatprep.subr.bf16.mxu0 0
        %727 = vmatpush1.bf16.msra.mxu0 0
        %728 = vmatprep.subr.bf16.mxu0 0
        %729 = vmatpush1.bf16.msra.mxu0 0
        %730 = vmatprep.subr.bf16.mxu0 0
        %731 = vmatpush1.bf16.msra.mxu0 0
        %732 = vmatprep.subr.bf16.mxu0 0
        %733 = vmatpush1.bf16.msra.mxu0 0
        %734 = vmatprep.subr.bf16.mxu0 0
        %735 = vmatpush1.bf16.msra.mxu0 0
        %736 = vmatprep.subr.bf16.mxu0 0
        %737 = vmatpush1.bf16.msra.mxu0 0
        %738 = vmatprep.subr.bf16.mxu0 0
        %739 = vmatpush1.bf16.msra.mxu0 0
        %740 = vmatprep.subr.bf16.mxu0 0
        %741 = vmatpush1.bf16.msra.mxu0 0
        %742 = vmatprep.subr.bf16.mxu0 0
        %743 = vmatpush1.bf16.msra.mxu0 0
        %744 = vmatprep.subr.bf16.mxu0 0
        %745 = vmatpush1.bf16.msra.mxu0 0
        %746 = vmatprep.subr.bf16.mxu0 0
        %747 = vmatpush1.bf16.msra.mxu0 0
        %748 = vmatprep.subr.bf16.mxu0 0
        %749 = vmatpush1.bf16.msra.mxu0 0
        %750 = vmatprep.mubr.bf16.mxu0 0
        %751 = vmatmul.mubr.bf16.gmra.mrb[0].mxu0 %v712
        %v752 = vpop.f32.mrb[0].mxu0
        %v753 = vadd.f32 0.0, %v752
        %v754 = vpop.f32.mrb[0].mxu0
        %v755 = vpop.f32.mrb[0].mxu0
        %v756 = vpop.f32.mrb[0].mxu0
        %757 = vdwg.mxu0
        %759 = vrot.lane.b32.xlu0 %v646, 120
        %v760 = vpop.permute.xlu0 %759
        %762 = vrot.lane.b32.xlu0 %v647, 120
        %v763 = vpop.permute.xlu0 %762
        %v765 = vsel %vm651, %v760, 0
        %v768 = vsel %vm651, %v763, 0
        %770 = vmatprep.subr.bf16.mxu0 0
        %771 = vmatpush1.bf16.xpose.msra.mxu0 %v768
        %772 = vmatprep.subr.bf16.mxu0 0
        %773 = vmatpush1.bf16.xpose.msra.mxu0 0
        %774 = vmatprep.subr.bf16.mxu0 0
        %775 = vmatpush1.bf16.xpose.msra.mxu0 0
        %776 = vmatprep.subr.bf16.mxu0 0
        %777 = vmatpush1.bf16.xpose.msra.mxu0 0
        %778 = vmatprep.subr.bf16.mxu0 0
        %779 = vmatpush1.bf16.xpose.msra.mxu0 0
        %780 = vmatprep.subr.bf16.mxu0 0
        %781 = vmatpush1.bf16.xpose.msra.mxu0 0
        %782 = vmatprep.subr.bf16.mxu0 0
        %783 = vmatpush1.bf16.xpose.msra.mxu0 0
        %784 = vmatprep.subr.bf16.mxu0 0
        %785 = vmatpush1.bf16.xpose.msra.mxu0 0
        %786 = vmatprep.subr.bf16.mxu0 0
        %787 = vmatpush1.bf16.xpose.msra.mxu0 0
        %788 = vmatprep.subr.bf16.mxu0 0
        %789 = vmatpush1.bf16.xpose.msra.mxu0 0
        %790 = vmatprep.subr.bf16.mxu0 0
        %791 = vmatpush1.bf16.xpose.msra.mxu0 0
        %792 = vmatprep.subr.bf16.mxu0 0
        %793 = vmatpush1.bf16.xpose.msra.mxu0 0
        %794 = vmatprep.subr.bf16.mxu0 0
        %795 = vmatpush1.bf16.xpose.msra.mxu0 0
        %796 = vmatprep.subr.bf16.mxu0 0
        %797 = vmatpush1.bf16.xpose.msra.mxu0 0
        %798 = vmatprep.subr.bf16.mxu0 0
        %799 = vmatpush1.bf16.xpose.msra.mxu0 0
        %800 = vmatprep.subr.bf16.mxu0 0
        %801 = vmatpush1.bf16.xpose.msra.mxu0 0
        %802 = vmatprep.mubr.bf16.mxu0 0
        %803 = vmatmul.mubr.bf16.gmra.mrb[0].mxu0 %v765
        %v804 = vpop.f32.mrb[0].mxu0
        %v805 = vadd.f32 0.0, %v804
        %v806 = vpop.f32.mrb[0].mxu0
        %v807 = vpop.f32.mrb[0].mxu0
        %v808 = vpop.f32.mrb[0].mxu0
        %809 = vdwg.mxu0
        %v810 = vsel %vm650, -10000.0, %v805
        %v811 = vsel %vm651, %v810, -inf
        %812 = vmax.xlane.f32.xlu0 %v811
        %v813 = vpop.xlane.xlu0 %812
        %v814 = vsub.f32 %v810, %v813
        %v815 = vmul.f32 %v814, 1.442695
        %v816 = vpow.pop %v815
        %v817 = vsel %vm651, %v816, 0.0
        %818 = vadd.xlane.f32.xlu0 %v817
        %v819 = vpop.xlane.xlu0 %818
        %v820 = vrcp.pop %v819
        %v821 = vmul.f32 %v816, %v820
        %v822 = vpack.c.bf16 %v821, %v821
        %824 = vrot.lane.b32.xlu0 %v648, 120
        %v825 = vpop.permute.xlu0 %824
        %v827 = vsel %vm651, %v822, 0
        %v830 = vsel %vm714, %v825, 0
        %832 = vmatprep.subr.bf16.mxu0 0
        %833 = vmatpush1.bf16.msra.mxu0 %v830
        %834 = vmatprep.subr.bf16.mxu0 0
        %835 = vmatpush1.bf16.msra.mxu0 0
        %836 = vmatprep.subr.bf16.mxu0 0
        %837 = vmatpush1.bf16.msra.mxu0 0
        %838 = vmatprep.subr.bf16.mxu0 0
        %839 = vmatpush1.bf16.msra.mxu0 0
        %840 = vmatprep.subr.bf16.mxu0 0
        %841 = vmatpush1.bf16.msra.mxu0 0
        %842 = vmatprep.subr.bf16.mxu0 0
        %843 = vmatpush1.bf16.msra.mxu0 0
        %844 = vmatprep.subr.bf16.mxu0 0
        %845 = vmatpush1.bf16.msra.mxu0 0
        %846 = vmatprep.subr.bf16.mxu0 0
        %847 = vmatpush1.bf16.msra.mxu0 0
        %848 = vmatprep.subr.bf16.mxu0 0
        %849 = vmatpush1.bf16.msra.mxu0 0
        %850 = vmatprep.subr.bf16.mxu0 0
        %851 = vmatpush1.bf16.msra.mxu0 0
        %852 = vmatprep.subr.bf16.mxu0 0
        %853 = vmatpush1.bf16.msra.mxu0 0
        %854 = vmatprep.subr.bf16.mxu0 0
        %855 = vmatpush1.bf16.msra.mxu0 0
        %856 = vmatprep.subr.bf16.mxu0 0
        %857 = vmatpush1.bf16.msra.mxu0 0
        %858 = vmatprep.subr.bf16.mxu0 0
        %859 = vmatpush1.bf16.msra.mxu0 0
        %860 = vmatprep.subr.bf16.mxu0 0
        %861 = vmatpush1.bf16.msra.mxu0 0
        %862 = vmatprep.subr.bf16.mxu0 0
        %863 = vmatpush1.bf16.msra.mxu0 0
        %864 = vmatprep.mubr.bf16.mxu0 0
        %865 = vmatmul.mubr.bf16.gmra.mrb[0].mxu0 %v827
        %v866 = vpop.f32.mrb[0].mxu0
        %v867 = vadd.f32 0.0, %v866
        %v868 = vpop.f32.mrb[0].mxu0
        %v869 = vpop.f32.mrb[0].mxu0
        %v870 = vpop.f32.mrb[0].mxu0
        %871 = vdwg.mxu0
        %872 = vrot.lane.b32.xlu0 %v646, 112
        %v873 = vpop.permute.xlu0 %872
        %874 = vrot.lane.b32.xlu0 %v647, 112
        %v875 = vpop.permute.xlu0 %874
        %v877 = vsel %vm651, %v873, 0
        %v880 = vsel %vm651, %v875, 0
        %882 = vmatprep.subr.bf16.mxu0 0
        %883 = vmatpush1.bf16.xpose.msra.mxu0 %v880
        %884 = vmatprep.subr.bf16.mxu0 0
        %885 = vmatpush1.bf16.xpose.msra.mxu0 0
        %886 = vmatprep.subr.bf16.mxu0 0
        %887 = vmatpush1.bf16.xpose.msra.mxu0 0
        %888 = vmatprep.subr.bf16.mxu0 0
        %889 = vmatpush1.bf16.xpose.msra.mxu0 0
        %890 = vmatprep.subr.bf16.mxu0 0
        %891 = vmatpush1.bf16.xpose.msra.mxu0 0
        %892 = vmatprep.subr.bf16.mxu0 0
        %893 = vmatpush1.bf16.xpose.msra.mxu0 0
        %894 = vmatprep.subr.bf16.mxu0 0
        %895 = vmatpush1.bf16.xpose.msra.mxu0 0
        %896 = vmatprep.subr.bf16.mxu0 0
        %897 = vmatpush1.bf16.xpose.msra.mxu0 0
        %898 = vmatprep.subr.bf16.mxu0 0
        %899 = vmatpush1.bf16.xpose.msra.mxu0 0
        %900 = vmatprep.subr.bf16.mxu0 0
        %901 = vmatpush1.bf16.xpose.msra.mxu0 0
        %902 = vmatprep.subr.bf16.mxu0 0
        %903 = vmatpush1.bf16.xpose.msra.mxu0 0
        %904 = vmatprep.subr.bf16.mxu0 0
        %905 = vmatpush1.bf16.xpose.msra.mxu0 0
        %906 = vmatprep.subr.bf16.mxu0 0
        %907 = vmatpush1.bf16.xpose.msra.mxu0 0
        %908 = vmatprep.subr.bf16.mxu0 0
        %909 = vmatpush1.bf16.xpose.msra.mxu0 0
        %910 = vmatprep.subr.bf16.mxu0 0
        %911 = vmatpush1.bf16.xpose.msra.mxu0 0
        %912 = vmatprep.subr.bf16.mxu0 0
        %913 = vmatpush1.bf16.xpose.msra.mxu0 0
        %914 = vmatprep.mubr.bf16.mxu0 0
        %915 = vmatmul.mubr.bf16.gmra.mrb[0].mxu0 %v877
        %v916 = vpop.f32.mrb[0].mxu0
        %v917 = vadd.f32 0.0, %v916
        %v918 = vpop.f32.mrb[0].mxu0
        %v919 = vpop.f32.mrb[0].mxu0
        %v920 = vpop.f32.mrb[0].mxu0
        %921 = vdwg.mxu0
        %v922 = vsel %vm650, -10000.0, %v917
        %v923 = vsel %vm651, %v922, -inf
        %924 = vmax.xlane.f32.xlu0 %v923
        %v925 = vpop.xlane.xlu0 %924
        %v926 = vsub.f32 %v922, %v925
        %v927 = vmul.f32 %v926, 1.442695
        %v928 = vpow.pop %v927
        %v929 = vsel %vm651, %v928, 0.0
        %930 = vadd.xlane.f32.xlu0 %v929
        %v931 = vpop.xlane.xlu0 %930
        %v932 = vrcp.pop %v931
        %v933 = vmul.f32 %v928, %v932
        %v934 = vpack.c.bf16 %v933, %v933
        %935 = vrot.lane.b32.xlu0 %v648, 112
        %v936 = vpop.permute.xlu0 %935
        %v938 = vsel %vm651, %v934, 0
        %v941 = vsel %vm714, %v936, 0
        %943 = vmatprep.subr.bf16.mxu0 0
        %944 = vmatpush1.bf16.msra.mxu0 %v941
        %945 = vmatprep.subr.bf16.mxu0 0
        %946 = vmatpush1.bf16.msra.mxu0 0
        %947 = vmatprep.subr.bf16.mxu0 0
        %948 = vmatpush1.bf16.msra.mxu0 0
        %949 = vmatprep.subr.bf16.mxu0 0
        %950 = vmatpush1.bf16.msra.mxu0 0
        %951 = vmatprep.subr.bf16.mxu0 0
        %952 = vmatpush1.bf16.msra.mxu0 0
        %953 = vmatprep.subr.bf16.mxu0 0
        %954 = vmatpush1.bf16.msra.mxu0 0
        %955 = vmatprep.subr.bf16.mxu0 0
        %956 = vmatpush1.bf16.msra.mxu0 0
        %957 = vmatprep.subr.bf16.mxu0 0
        %958 = vmatpush1.bf16.msra.mxu0 0
        %959 = vmatprep.subr.bf16.mxu0 0
        %960 = vmatpush1.bf16.msra.mxu0 0
        %961 = vmatprep.subr.bf16.mxu0 0
        %962 = vmatpush1.bf16.msra.mxu0 0
        %963 = vmatprep.subr.bf16.mxu0 0
        %964 = vmatpush1.bf16.msra.mxu0 0
        %965 = vmatprep.subr.bf16.mxu0 0
        %966 = vmatpush1.bf16.msra.mxu0 0
        %967 = vmatprep.subr.bf16.mxu0 0
        %968 = vmatpush1.bf16.msra.mxu0 0
        %969 = vmatprep.subr.bf16.mxu0 0
        %970 = vmatpush1.bf16.msra.mxu0 0
        %971 = vmatprep.subr.bf16.mxu0 0
        %972 = vmatpush1.bf16.msra.mxu0 0
        %973 = vmatprep.subr.bf16.mxu0 0
        %974 = vmatpush1.bf16.msra.mxu0 0
        %975 = vmatprep.mubr.bf16.mxu0 0
        %976 = vmatmul.mubr.bf16.gmra.mrb[0].mxu0 %v938
        %v977 = vpop.f32.mrb[0].mxu0
        %v978 = vadd.f32 0.0, %v977
        %v979 = vpop.f32.mrb[0].mxu0
        %v980 = vpop.f32.mrb[0].mxu0
        %v981 = vpop.f32.mrb[0].mxu0
        %982 = vdwg.mxu0
        %983 = vrot.lane.b32.xlu0 %v646, 104
        %v984 = vpop.permute.xlu0 %983
        %985 = vrot.lane.b32.xlu0 %v647, 104
        %v986 = vpop.permute.xlu0 %985
        %v988 = vsel %vm651, %v984, 0
        %v991 = vsel %vm651, %v986, 0
        %993 = vmatprep.subr.bf16.mxu0 0
        %994 = vmatpush1.bf16.xpose.msra.mxu0 %v991
        %995 = vmatprep.subr.bf16.mxu0 0
        %996 = vmatpush1.bf16.xpose.msra.mxu0 0
        %997 = vmatprep.subr.bf16.mxu0 0
        %998 = vmatpush1.bf16.xpose.msra.mxu0 0
        %999 = vmatprep.subr.bf16.mxu0 0
        %1000 = vmatpush1.bf16.xpose.msra.mxu0 0
        %1001 = vmatprep.subr.bf16.mxu0 0
        %1002 = vmatpush1.bf16.xpose.msra.mxu0 0
        %1003 = vmatprep.subr.bf16.mxu0 0
        %1004 = vmatpush1.bf16.xpose.msra.mxu0 0
        %1005 = vmatprep.subr.bf16.mxu0 0
        %1006 = vmatpush1.bf16.xpose.msra.mxu0 0
        %1007 = vmatprep.subr.bf16.mxu0 0
        %1008 = vmatpush1.bf16.xpose.msra.mxu0 0
        %1009 = vmatprep.subr.bf16.mxu0 0
        %1010 = vmatpush1.bf16.xpose.msra.mxu0 0
        %1011 = vmatprep.subr.bf16.mxu0 0
        %1012 = vmatpush1.bf16.xpose.msra.mxu0 0
        %1013 = vmatprep.subr.bf16.mxu0 0
        %1014 = vmatpush1.bf16.xpose.msra.mxu0 0
        %1015 = vmatprep.subr.bf16.mxu0 0
        %1016 = vmatpush1.bf16.xpose.msra.mxu0 0
        %1017 = vmatprep.subr.bf16.mxu0 0
        %1018 = vmatpush1.bf16.xpose.msra.mxu0 0
        %1019 = vmatprep.subr.bf16.mxu0 0
        %1020 = vmatpush1.bf16.xpose.msra.mxu0 0
        %1021 = vmatprep.subr.bf16.mxu0 0
        %1022 = vmatpush1.bf16.xpose.msra.mxu0 0
        %1023 = vmatprep.subr.bf16.mxu0 0
        %1024 = vmatpush1.bf16.xpose.msra.mxu0 0
        %1025 = vmatprep.mubr.bf16.mxu0 0
        %1026 = vmatmul.mubr.bf16.gmra.mrb[0].mxu0 %v988
        %v1027 = vpop.f32.mrb[0].mxu0
        %v1028 = vadd.f32 0.0, %v1027
        %v1029 = vpop.f32.mrb[0].mxu0
        %v1030 = vpop.f32.mrb[0].mxu0
        %v1031 = vpop.f32.mrb[0].mxu0
        %1032 = vdwg.mxu0
        %v1033 = vsel %vm650, -10000.0, %v1028
        %v1034 = vsel %vm651, %v1033, -inf
        %1035 = vmax.xlane.f32.xlu0 %v1034
        %v1036 = vpop.xlane.xlu0 %1035
        %v1037 = vsub.f32 %v1033, %v1036
        %v1038 = vmul.f32 %v1037, 1.442695
        %v1039 = vpow.pop %v1038
        %v1040 = vsel %vm651, %v1039, 0.0
        %1041 = vadd.xlane.f32.xlu0 %v1040
        %v1042 = vpop.xlane.xlu0 %1041
        %v1043 = vrcp.pop %v1042
        %v1044 = vmul.f32 %v1039, %v1043
        %v1045 = vpack.c.bf16 %v1044, %v1044
        %1046 = vrot.lane.b32.xlu0 %v648, 104
        %v1047 = vpop.permute.xlu0 %1046
        %v1049 = vsel %vm651, %v1045, 0
        %v1052 = vsel %vm714, %v1047, 0
        %1054 = vmatprep.subr.bf16.mxu0 0
        %1055 = vmatpush1.bf16.msra.mxu0 %v1052
        %1056 = vmatprep.subr.bf16.mxu0 0
        %1057 = vmatpush1.bf16.msra.mxu0 0
        %1058 = vmatprep.subr.bf16.mxu0 0
        %1059 = vmatpush1.bf16.msra.mxu0 0
        %1060 = vmatprep.subr.bf16.mxu0 0
        %1061 = vmatpush1.bf16.msra.mxu0 0
        %1062 = vmatprep.subr.bf16.mxu0 0
        %1063 = vmatpush1.bf16.msra.mxu0 0
        %1064 = vmatprep.subr.bf16.mxu0 0
        %1065 = vmatpush1.bf16.msra.mxu0 0
        %1066 = vmatprep.subr.bf16.mxu0 0
        %1067 = vmatpush1.bf16.msra.mxu0 0
        %1068 = vmatprep.subr.bf16.mxu0 0
        %1069 = vmatpush1.bf16.msra.mxu0 0
        %1070 = vmatprep.subr.bf16.mxu0 0
        %1071 = vmatpush1.bf16.msra.mxu0 0
        %1072 = vmatprep.subr.bf16.mxu0 0
        %1073 = vmatpush1.bf16.msra.mxu0 0
        %1074 = vmatprep.subr.bf16.mxu0 0
        %1075 = vmatpush1.bf16.msra.mxu0 0
        %1076 = vmatprep.subr.bf16.mxu0 0
        %1077 = vmatpush1.bf16.msra.mxu0 0
        %1078 = vmatprep.subr.bf16.mxu0 0
        %1079 = vmatpush1.bf16.msra.mxu0 0
        %1080 = vmatprep.subr.bf16.mxu0 0
        %1081 = vmatpush1.bf16.msra.mxu0 0
        %1082 = vmatprep.subr.bf16.mxu0 0
        %1083 = vmatpush1.bf16.msra.mxu0 0
        %1084 = vmatprep.subr.bf16.mxu0 0
        %1085 = vmatpush1.bf16.msra.mxu0 0
        %1086 = vmatprep.mubr.bf16.mxu0 0
        %1087 = vmatmul.mubr.bf16.gmra.mrb[0].mxu0 %v1049
        %v1088 = vpop.f32.mrb[0].mxu0
        %v1089 = vadd.f32 0.0, %v1088
        %v1090 = vpop.f32.mrb[0].mxu0
        %v1091 = vpop.f32.mrb[0].mxu0
        %v1092 = vpop.f32.mrb[0].mxu0
        %1093 = vdwg.mxu0
        %1095 = vrot.lane.b32.xlu0 %v867, 8
        %v1096 = vpop.permute.xlu0 %1095
        %1099 = vrot.lane.b32.xlu0 %v978, 16
        %v1100 = vpop.permute.xlu0 %1099
        %1103 = vrot.lane.b32.xlu0 %v1089, 24
        %v1104 = vpop.permute.xlu0 %1103
        %v1106 = vsel %vm651, %v753, %v1096
        %vm1107 = vcmask 130048
        %v1108 = vsel %vm1107, %v1106, %v1100
        %vm1109 = vcmask 195584
        %v1110 = vsel %vm1109, %v1108, %v1104
        %v1111 = vpack.c.bf16 %v1110, %v1110
        %v1112 = vld [vmem:[%s6] sm:$0xf]
        %v1113 = vld [vmem:[%s6 + $0x4] sm:$0xf]
        %v1114 = vld [vmem:[%s6 + $0x8] sm:$0xf]
        %v1115 = vld [vmem:[%s6 + $0xc] sm:$0xf]
        %v1116 = vld [vmem:[%s7] sm:$0x1]
        %v1118 = vlaneseq
        %v1119 = vshrl.u32 %v1118, 7
        %v1120 = vsub.s32 0, %v1119
        %v1121 = vrot.slane %v1116, %v1120
        %v1127 = vunpack.c.l.b16 %v1112
        %v1128 = vunpack.c.l.b16 %v1113
        %v1129 = vunpack.c.l.b16 %v1114
        %v1130 = vunpack.c.l.b16 %v1115
        %v1131 = vpack.c.b16 %v1128, %v1127
        %v1132 = vpack.c.b16 %v1130, %v1129
        %v1136 = vsel %vm471, %v1111, 0
        %1138 = vmatprep.subr.bf16.mxu0 0
        %1139 = vmatpush1.bf16.msra.mxu0 %v1131
        %1140 = vmatprep.subr.bf16.mxu0 0
        %1141 = vmatpush1.bf16.msra.mxu0 %v1132
        %1142 = vmatprep.subr.bf16.mxu0 0
        %1143 = vmatpush1.bf16.msra.mxu0 0
        %1144 = vmatprep.subr.bf16.mxu0 0
        %1145 = vmatpush1.bf16.msra.mxu0 0
        %1146 = vmatprep.subr.bf16.mxu0 0
        %1147 = vmatpush1.bf16.msra.mxu0 0
        %1148 = vmatprep.subr.bf16.mxu0 0
        %1149 = vmatpush1.bf16.msra.mxu0 0
        %1150 = vmatprep.subr.bf16.mxu0 0
        %1151 = vmatpush1.bf16.msra.mxu0 0
        %1152 = vmatprep.subr.bf16.mxu0 0
        %1153 = vmatpush1.bf16.msra.mxu0 0
        %1154 = vmatprep.subr.bf16.mxu0 0
        %1155 = vmatpush1.bf16.msra.mxu0 0
        %1156 = vmatprep.subr.bf16.mxu0 0
        %1157 = vmatpush1.bf16.msra.mxu0 0
        %1158 = vmatprep.subr.bf16.mxu0 0
        %1159 = vmatpush1.bf16.msra.mxu0 0
        %1160 = vmatprep.subr.bf16.mxu0 0
        %1161 = vmatpush1.bf16.msra.mxu0 0
        %1162 = vmatprep.subr.bf16.mxu0 0
        %1163 = vmatpush1.bf16.msra.mxu0 0
        %1164 = vmatprep.subr.bf16.mxu0 0
        %1165 = vmatpush1.bf16.msra.mxu0 0
        %1166 = vmatprep.subr.bf16.mxu0 0
        %1167 = vmatpush1.bf16.msra.mxu0 0
        %1168 = vmatprep.subr.bf16.mxu0 0
        %1169 = vmatpush1.bf16.msra.mxu0 0
        %1170 = vmatprep.mubr.bf16.mxu0 0
        %1171 = vmatmul.mubr.bf16.gmra.mrb[0].mxu0 %v1136
        %v1172 = vpop.f32.mrb[0].mxu0
        %v1173 = vadd.f32 %v1121, %v1172
        %v1174 = vpop.f32.mrb[0].mxu0
        %v1175 = vpop.f32.mrb[0].mxu0
        %v1176 = vpop.f32.mrb[0].mxu0
        %1177 = vdwg.mxu0
        %1178 = vst.msk [vmem:[%s442] sm:$0xff] %vm471, %v1173
        %s1179 = sand.u32 %s227, 1
        %s1180 = scalar_lea.sflag [#allocation4], %s1179
        %s1181 = sand.u32 %s227, 1
        %s1182 = smul.addr %s1181, 8
        %s1183 = scalar_lea.vmem [#allocation11], %s1182
        // Predicated region
        $region73: #{tpu_custom_call.1} parent=51 // pred_check
          %p1184 = pneg %p237
        $region74: #{tpu_custom_call.1} parent=51 // pred_check_branch
          %1186 = sbr.rel (%p1184) target = $region76
        $region75: #{tpu_custom_call.1} parent=51 // pred_region
          %s1188 = ssub.s32 128, 128
          %1189 = vsyncadd %s1180, %s1188
          %s1190 = smul.addr %s31, 128
          %s1191 = scalar_lea.hbm %s8, %s1190
          %s1193 = sshll.u32 %s1183, 4
          %s1194 = int_to_ptr.vmem [resolvable:$true] %s1193
          %1196 = dma.vmem_to_hbm [thread:$0]  %s1194, 128, %s1191, %s1180
        $region76: #{tpu_custom_call.1} parent=51 // pred_fallthru
          _
      $region52: #{tpu_custom_call.1} parent=5 // pred_fallthru
        _
      %p1197 = scmp.le.s32.totalorder 2, %s26
      // Predicated region
      $region77: #{tpu_custom_call.1} parent=5 // pred_check
        %p1198 = pneg %p1197
      $region78: #{tpu_custom_call.1} parent=5 // pred_check_branch
        %1200 = sbr.rel (%p1198) target = $region80
      $region79: #{tpu_custom_call.1} parent=5 // pred_region
        %s1201 = ssub.s32 %s26, 2
        // Predicated region
        $region81: #{tpu_custom_call.1} parent=79 // pred_check
          %p1202 = pneg %p243
        $region82: #{tpu_custom_call.1} parent=79 // pred_check_branch
          %1204 = sbr.rel (%p1202) target = $region84
        $region83: #{tpu_custom_call.1} parent=79 // pred_region
          %s1205 = sand.u32 %s228, 1
          %s1206 = scalar_lea.sflag [#allocation4], %s1205
          %s1207 = sand.u32 %s228, 1
          %s1208 = smul.addr %s1207, 8
          %s1209 = scalar_lea.vmem [#allocation11], %s1208
          %1210 = dma.done %s1206, 128
        $region84: #{tpu_custom_call.1} parent=79 // pred_fallthru
          _
      $region80: #{tpu_custom_call.1} parent=5 // pred_fallthru
        _
    $region6: #{tpu_custom_call.1} parent=1 // loop_footer
      %s30 = sadd.s32 1, %s26
    $region7: #{tpu_custom_call.1} parent=1 // loop_footer_branch
      %25 = sbr.rel target = $region3
    $region8: #{tpu_custom_call.1} parent=1 // loop_exit
      _
    %1211 = vsyncpa [#allocation3], 1
    %s1212 = scalar_lea.sflag [#allocation3], 1
    %1213 = vsyncpa %s1212, 1
    %1214 = vsyncpa [#allocation6], 1
    %s1215 = scalar_lea.sflag [#allocation6], 1
    %1216 = vsyncpa %s1215, 1
    %1217 = vsyncpa [#allocation9], 1
    %s1218 = scalar_lea.sflag [#allocation9], 1
    %1219 = vsyncpa %s1218, 1
    %1220 = vsyncpa [#allocation4], 1
    %s1221 = scalar_lea.sflag [#allocation4], 1
    %1222 = vsyncpa %s1221, 1

</llo_original>
